<compile_context>
chip_gen: v7x
topology: tpu7x:2x2x1
jax: 0.10.0
libtpu: 0.0.40
codegen_flags: <defaults>
</compile_context>

<pallas_src>
import numpy as np
import jax
import jax.numpy as jnp
from jax import lax
from jax.experimental import pallas as pl
from jax.experimental.pallas import tpu as pltpu

# ----------------------------------------------------------------------------
# Model configuration (small, synthetic)
# ----------------------------------------------------------------------------
CFG = dict(
    vocab=40,               # phoneme vocab (padding_idx = 0)
    H=32,                   # encoder_hidden == decoder_hidden
    heads=2, dk=16, dv=16,  # multi-head attention
    ffn=64, ffn_kernel=(9, 1),
    enc_layers=1, dec_layers=1,
    vp_filter=32, vp_kernel=3,   # variance predictor
    n_bins=16,              # pitch / energy quantization bins
    n_mel=20,               # n_mel_channels
    post_dim=64, post_kernel=5, post_layers=5,
    max_pos=100,            # sinusoidal position table length
    hed_dim=12,             # HED feature dim (hed_proj: 12 -> H)
)

BF16 = jnp.bfloat16


# ----------------------------------------------------------------------------
# Small in-kernel helpers
# ----------------------------------------------------------------------------
def _ln(x, g, b, eps=1e-5):
    """LayerNorm over the last axis (gamma/beta are (1, C))."""
    mu = jnp.mean(x, axis=-1, keepdims=True)
    var = jnp.mean(jnp.square(x - mu), axis=-1, keepdims=True)
    return (x - mu) * lax.rsqrt(var + eps) * g + b


def _conv_same(x, w_ref, nblk, tin):
    """'Same' 1-D conv over rows of x (nblk*tin, Cin), weights (K, Cin, Cout).

    Implemented as a sum of K shifted matmuls: for each tap k, one MXU matmul
    over ALL rows, then a static row shift (register concat with zeros) and a
    per-sample boundary mask so samples packed in the same block never leak
    into each other.  No VMEM scratch, no zero-fill of an im2col buffer.
    """
    K, cin, cout = w_ref.shape
    pad = (K - 1) // 2
    n = nblk * tin
    xb = x.astype(BF16)
    pos = lax.broadcasted_iota(jnp.int32, (nblk, tin, 1), 1).reshape(n, 1)
    acc = jnp.zeros((n, cout), jnp.float32)
    for k in range(K):
        off = k - pad
        wk = w_ref[k].astype(BF16)                         # (Cin, Cout)
        yk = jnp.dot(xb, wk, preferred_element_type=jnp.float32)
        if off > 0:
            shifted = jnp.concatenate(
                [yk[off:, :], jnp.zeros((off, cout), jnp.float32)], axis=0)
        elif off < 0:
            shifted = jnp.concatenate(
                [jnp.zeros((-off, cout), jnp.float32), yk[:n + off, :]], axis=0)
        else:
            shifted = yk
        valid = jnp.logical_and(pos + off >= 0, pos + off < tin)
        acc = acc + jnp.where(valid, shifted, 0.0)
    return acc


def _w_spec(arr):
    """Full-array BlockSpec for a constant weight under a 1-D grid."""
    nd = arr.ndim
    return pl.BlockSpec(arr.shape, lambda *_: (0,) * nd)


def _pick_bblk(batch, target=16):
    """Largest divisor of `batch` that is <= target (batch items per step)."""
    for bb in range(min(batch, target), 0, -1):
        if batch % bb == 0:
            return bb
    return 1


# ----------------------------------------------------------------------------
# Fused FFT block kernel  (attention + FFN, grid over batch blocks)
# ----------------------------------------------------------------------------
def _fft_block_kernel(bblk, L, H, nh, dk, dv, K1, temperature):
    n = bblk * L
    inv_t = 1.0 / float(temperature)

    def kern(x_ref, kpad_ref, pcol_ref,
             wqkv_ref, bqkv_ref, wfc_ref, bfc_ref, g1_ref, be1_ref,
             w1_ref, cb1_ref, w2_ref, cb2_ref, g2_ref, be2_ref,
             o_ref):
        xf = x_ref[...].reshape(n, H)                       # (bblk*L, H)
        keep = 1.0 - pcol_ref[...].reshape(n, 1)            # 0.0 = padded row
        kpad = kpad_ref[...]                                # (bblk, 1, L)

        # ---- fused QKV projection: one (n, H) x (H, nh*(2dk+dv)) matmul ----
        qkv = jnp.dot(xf.astype(BF16), wqkv_ref[...].astype(BF16),
                      preferred_element_type=jnp.float32) + bqkv_ref[...]

        # ---- per-sample, per-head attention; fc proj folded into the loop ----
        wfc = wfc_ref[...].astype(BF16)
        att_rows = []
        for b in range(bblk):
            km = kpad[b]                                    # (1, L), 1.0 = pad key
            qkv_b = qkv[b * L:(b + 1) * L, :]
            att_b = jnp.zeros((L, H), jnp.float32)
            for h in range(nh):
                q = qkv_b[:, h * dk:(h + 1) * dk].astype(BF16)
                k = qkv_b[:, nh * dk + h * dk: nh * dk + (h + 1) * dk].astype(BF16)
                v = qkv_b[:, 2 * nh * dk + h * dv: 2 * nh * dk + (h + 1) * dv].astype(BF16)
                s = lax.dot_general(q, k, (((1,), (1,)), ((), ())),
                                    preferred_element_type=jnp.float32) * inv_t
                s = jnp.where(km > 0.5, -1e9, s)            # masked_fill(mask, -inf)
                m = jnp.max(s, axis=-1, keepdims=True)
                e = jnp.exp(s - m)
                p = e * pl.reciprocal(jnp.sum(e, axis=-1, keepdims=True), approx=True)
                oh = jnp.dot(p.astype(BF16), v, preferred_element_type=jnp.float32)
                att_b = att_b + jnp.dot(oh.astype(BF16), wfc[h * dv:(h + 1) * dv, :],
                                        preferred_element_type=jnp.float32)
            att_rows.append(att_b)
        att = att_rows[0] if bblk == 1 else jnp.concatenate(att_rows, axis=0)
        att = att + bfc_ref[...]

        y = _ln(att + xf, g1_ref[...], be1_ref[...]) * keep  # masked_fill(mask, 0)

        # ---- position-wise FFN: conv(K1) as shifted matmuls + 1x1 conv ----
        h1 = _conv_same(y, w1_ref, bblk, L) + cb1_ref[...]
        h1 = jnp.maximum(h1, 0.0)
        h2 = jnp.dot(h1.astype(BF16), w2_ref[...].astype(BF16),
                     preferred_element_type=jnp.float32) + cb2_ref[...]
        z = _ln(h2 + y, g2_ref[...], be2_ref[...]) * keep
        o_ref[...] = z.reshape(bblk, L, H)

    return kern


def fft_block_apply(lp, x, kpad3, pad_col, bblk):
    """x: (B, L, H); kpad3: (B, 1, L) float key-pad mask; pad_col: (B, L, 1)."""
    B, L, H = x.shape
    nB = B // bblk
    nh, dk, dv = CFG["heads"], CFG["dk"], CFG["dv"]
    K1, K2 = CFG["ffn_kernel"]
    assert K2 == 1, "second FFN conv is expected to be pointwise"
    kern = _fft_block_kernel(bblk, L, H, nh, dk, dv, K1, float(np.sqrt(dk)))
    weights = [lp["wqkv"], lp["bqkv"], lp["wfc"], lp["bfc"],
               lp["ln1_g"], lp["ln1_b"], lp["w1"], lp["b1"],
               lp["w2"], lp["b2"], lp["ln2_g"], lp["ln2_b"]]
    return pl.pallas_call(
        kern,
        out_shape=jax.ShapeDtypeStruct((B, L, H), jnp.float32),
        grid=(nB,),
        in_specs=([pl.BlockSpec((bblk, L, H), lambda b: (b, 0, 0)),
                   pl.BlockSpec((bblk, 1, L), lambda b: (b, 0, 0)),
                   pl.BlockSpec((bblk, L, 1), lambda b: (b, 0, 0))]
                  + [_w_spec(w) for w in weights]),
        out_specs=pl.BlockSpec((bblk, L, H), lambda b: (b, 0, 0)),
        compiler_params=pltpu.CompilerParams(
            dimension_semantics=("parallel",)),
    )(x, kpad3, pad_col, *weights)


# ----------------------------------------------------------------------------
# Fused variance predictor kernel (1 or more predictors sharing the same x)
# ----------------------------------------------------------------------------
def _var_pred_kernel(bblk, T, H, F, K, n_pred):
    n = bblk * T

    def kern(x_ref, keep_ref, *rest):
        wrefs = rest[:10 * n_pred]
        orefs = rest[10 * n_pred:]
        x = x_ref[...].reshape(n, H)
        keep = keep_ref[...].reshape(1, n)                  # lane-dense keep mask
        for p in range(n_pred):
            (w1, b1, g1, bt1, w2, b2, g2, bt2, wl, bl) = wrefs[10 * p:10 * p + 10]
            h = _conv_same(x, w1, bblk, T) + b1[...]
            h = _ln(jnp.maximum(h, 0.0), g1[...], bt1[...])
            h = _conv_same(h, w2, bblk, T) + b2[...]
            h = _ln(jnp.maximum(h, 0.0), g2[...], bt2[...])
            # Linear(F -> 1), emitted lane-dense as (1, n): wl (1,F) x h (n,F)^T
            r = lax.dot_general(wl[...].astype(BF16), h.astype(BF16),
                                (((1,), (1,)), ((), ())),
                                preferred_element_type=jnp.float32)
            orefs[p][...] = ((r + bl[...]) * keep).reshape(1, 1, n)

    return kern


def variance_predictors_apply(preds, x, keep_flat3, bblk):
    """preds: list of predictor weight dicts (all read the same x).

    x: (B, T, H); keep_flat3: (B//bblk, 1, bblk*T) float (1 = keep).
    Returns a list of (B, T) prediction arrays, one per predictor.
    """
    B, T, H = x.shape
    nB = B // bblk
    n = bblk * T
    F, K = CFG["vp_filter"], CFG["vp_kernel"]
    n_pred = len(preds)
    kern = _var_pred_kernel(bblk, T, H, F, K, n_pred)
    weights = []
    for vp in preds:
        weights += [vp["w1"], vp["b1"], vp["g1"], vp["bt1"],
                    vp["w2"], vp["b2"], vp["g2"], vp["bt2"],
                    vp["wl"], vp["bl"]]
    outs = pl.pallas_call(
        kern,
        out_shape=tuple(jax.ShapeDtypeStruct((nB, 1, n), jnp.float32)
                        for _ in range(n_pred)),
        grid=(nB,),
        in_specs=([pl.BlockSpec((bblk, T, H), lambda b: (b, 0, 0)),
                   pl.BlockSpec((1, 1, n), lambda b: (b, 0, 0))]
                  + [_w_spec(w) for w in weights]),
        out_specs=tuple(pl.BlockSpec((1, 1, n), lambda b: (b, 0, 0))
                        for _ in range(n_pred)),
        compiler_params=pltpu.CompilerParams(
            dimension_semantics=("parallel",)),
    )(x, keep_flat3, *weights)
    if not isinstance(outs, (list, tuple)):
        outs = (outs,)
    return [o.reshape(B, T) for o in outs]


# ----------------------------------------------------------------------------
# Fused HED projection + concat-fuse kernel (grid over batch blocks)
# ----------------------------------------------------------------------------
def _hed_fuse_kernel(bblk, T, H, Dh, scale, use_hed):
    n = bblk * T

    def kern(*refs):
        if use_hed:
            x_ref, hed_ref, wp_ref, bp_ref, wa_ref, wb_ref, bf_ref, o_ref = refs
        else:
            x_ref, wa_ref, bf_ref, o_ref = refs
        x = x_ref[...].reshape(n, H)
        # hed_fuse(concat([x, hed_emb])) == x @ Wa + hed_emb @ Wb + b
        out = jnp.dot(x.astype(BF16), wa_ref[...].astype(BF16),
                      preferred_element_type=jnp.float32) + bf_ref[...]
        if use_hed:
            hd = hed_ref[...].reshape(n, Dh)
            he = jnp.tanh(jnp.dot(hd.astype(BF16), wp_ref[...].astype(BF16),
                                  preferred_element_type=jnp.float32)
                          + bp_ref[...]) * scale
            out = out + jnp.dot(he.astype(BF16), wb_ref[...].astype(BF16),
                                preferred_element_type=jnp.float32)
        o_ref[...] = out.reshape(bblk, T, H)

    return kern


def hed_fuse_apply(params, x, hed_t, scale, bblk):
    B, T, H = x.shape
    nB = B // bblk
    Dh = CFG["hed_dim"]
    use_hed = (hed_t is not None) and (scale != 0.0)
    kern = _hed_fuse_kernel(bblk, T, H, Dh, float(scale), use_hed)
    if use_hed:
        args = [x, hed_t, params["hed_proj_w"], params["hed_proj_b"],
                params["hed_fuse_wa"], params["hed_fuse_wb"], params["hed_fuse_b"]]
        in_specs = ([pl.BlockSpec((bblk, T, H), lambda b: (b, 0, 0)),
                     pl.BlockSpec((bblk, T, Dh), lambda b: (b, 0, 0))]
                    + [_w_spec(w) for w in args[2:]])
    else:
        args = [x, params["hed_fuse_wa"], params["hed_fuse_b"]]
        in_specs = ([pl.BlockSpec((bblk, T, H), lambda b: (b, 0, 0))]
                    + [_w_spec(w) for w in args[1:]])
    return pl.pallas_call(
        kern,
        out_shape=jax.ShapeDtypeStruct((B, T, H), jnp.float32),
        grid=(nB,),
        in_specs=in_specs,
        out_specs=pl.BlockSpec((bblk, T, H), lambda b: (b, 0, 0)),
        compiler_params=pltpu.CompilerParams(
            dimension_semantics=("parallel",)),
    )(*args)


# ----------------------------------------------------------------------------
# Fused mel_linear + PostNet (5x conv + BatchNorm(+tanh)) + residual kernel
# ----------------------------------------------------------------------------
def _mel_postnet_kernel(B, T, nlayers):
    def kern(dec_ref, wm_ref, bm_ref, *rest):
        layer_refs = rest[:4 * nlayers]
        mel_ref, post_ref = rest[4 * nlayers:]

        mel = jnp.dot(dec_ref[...].astype(BF16), wm_ref[...].astype(BF16),
                      preferred_element_type=jnp.float32) + bm_ref[...]
        mel_ref[...] = mel

        act = mel
        for i in range(nlayers):
            w, cb, g, beta = layer_refs[4 * i: 4 * i + 4]
            z = _conv_same(act, w, B, T) + cb[...]
            # TODO(synk): training-mode BatchNorm1d (batch stats over B*T rows,
            # no running stats); keeps this kernel un-gridded -- gridding for
            # v7x would require a cross-tile reduction of the BN statistics.
            mu = jnp.mean(z, axis=0, keepdims=True)
            var = jnp.mean(jnp.square(z - mu), axis=0, keepdims=True)
            z = (z - mu) * lax.rsqrt(var + 1e-5) * g[...] + beta[...]
            if i < nlayers - 1:
                z = jnp.tanh(z)
            act = z
        post_ref[...] = act + mel          # postnet(mel) + mel

    return kern


def mel_and_postnet(params, dec):
    """dec: (B, T, H) decoder output.  Returns (mel, mel + postnet(mel))."""
    B, T, H = dec.shape
    nm, L = CFG["n_mel"], CFG["post_layers"]
    dec2 = dec.reshape(B * T, H)
    layer_args = []
    for cp in params["postnet"]:
        layer_args += [cp["w"], cp["b"], cp["g"], cp["beta"]]
    mel2, post2 = pl.pallas_call(
        _mel_postnet_kernel(B, T, L),
        out_shape=(jax.ShapeDtypeStruct((B * T, nm), jnp.float32),
                   jax.ShapeDtypeStruct((B * T, nm), jnp.float32)),
    )(dec2, params["mel_w"], params["mel_b"], *layer_args)
    return mel2.reshape(B, T, nm), post2.reshape(B, T, nm)


# ----------------------------------------------------------------------------
# Parameter initialization (deterministic, synthetic)
# ----------------------------------------------------------------------------
class KeyGen:
    def __init__(self, seed):
        self.key = jax.random.PRNGKey(seed)

    def __call__(self):
        self.key, sub = jax.random.split(self.key)
        return sub


def init_linear(kg, din, dout):
    lim = (6.0 / (din + dout)) ** 0.5
    w = jax.random.uniform(kg(), (din, dout), jnp.float32, -lim, lim)
    return w, jnp.zeros((dout,), jnp.float32)


def init_conv(kg, K, cin, cout):
    lim = (6.0 / (K * cin + K * cout)) ** 0.5
    w = jax.random.uniform(kg(), (K, cin, cout), jnp.float32, -lim, lim)
    return w, jnp.zeros((cout,), jnp.float32)


def init_embedding(kg, n, d, padding_idx=None):
    e = jax.random.normal(kg(), (n, d), jnp.float32) * 0.1
    if padding_idx is not None:
        e = e.at[padding_idx].set(0.0)
    return e


def sinusoid_table(n_pos, d):
    pos = np.arange(n_pos)[:, None].astype(np.float64)
    i = np.arange(d)[None, :]
    angle = pos / np.power(10000.0, 2.0 * (i // 2) / d)
    table = np.zeros((n_pos, d))
    table[:, 0::2] = np.sin(angle[:, 0::2])
    table[:, 1::2] = np.cos(angle[:, 1::2])
    return jnp.asarray(table, jnp.float32)


def init_fft_block(kg):
    H, nh, dk, dv, F = CFG["H"], CFG["heads"], CFG["dk"], CFG["dv"], CFG["ffn"]
    K1, K2 = CFG["ffn_kernel"]
    wq, bq = init_linear(kg, H, nh * dk)
    wk, bk = init_linear(kg, H, nh * dk)
    wv, bv = init_linear(kg, H, nh * dv)
    wfc, bfc = init_linear(kg, nh * dv, H)
    w1, b1 = init_conv(kg, K1, H, F)              # (K1, H, F)
    w2, b2 = init_conv(kg, K2, F, H)              # (1, F, H)
    return dict(
        wqkv=jnp.concatenate([wq, wk, wv], axis=1),            # (H, nh*(2dk+dv))
        bqkv=jnp.concatenate([bq, bk, bv]).reshape(1, -1),
        wfc=wfc, bfc=bfc.reshape(1, H),
        ln1_g=jnp.ones((1, H), jnp.float32), ln1_b=jnp.zeros((1, H), jnp.float32),
        w1=w1, b1=b1.reshape(1, F),
        w2=w2.reshape(F, H), b2=b2.reshape(1, H),
        ln2_g=jnp.ones((1, H), jnp.float32), ln2_b=jnp.zeros((1, H), jnp.float32),
    )


def init_var_predictor(kg):
    H, F, K = CFG["H"], CFG["vp_filter"], CFG["vp_kernel"]
    c1, b1 = init_conv(kg, K, H, F)               # (K, H, F)
    c2, b2 = init_conv(kg, K, F, F)               # (K, F, F)
    wl, bl = init_linear(kg, F, 1)
    return dict(
        w1=c1, b1=b1.reshape(1, F),
        g1=jnp.ones((1, F), jnp.float32), bt1=jnp.zeros((1, F), jnp.float32),
        w2=c2, b2=b2.reshape(1, F),
        g2=jnp.ones((1, F), jnp.float32), bt2=jnp.zeros((1, F), jnp.float32),
        wl=wl.reshape(1, F), bl=bl.reshape(1, 1),
    )


def init_postnet(kg):
    nm, pd, K, L = CFG["n_mel"], CFG["post_dim"], CFG["post_kernel"], CFG["post_layers"]
    dims = [nm] + [pd] * (L - 1) + [nm]
    convs = []
    for i in range(L):
        w, b = init_conv(kg, K, dims[i], dims[i + 1])          # (K, Cin, Cout)
        convs.append(dict(
            w=w,
            b=b.reshape(1, dims[i + 1]),
            g=jnp.ones((1, dims[i + 1]), jnp.float32),
            beta=jnp.zeros((1, dims[i + 1]), jnp.float32),
        ))
    return convs


def init_params(seed=0):
    kg = KeyGen(seed)
    H, nm = CFG["H"], CFG["n_mel"]
    wmel, bmel = init_linear(kg, H, nm)
    wp, bp = init_linear(kg, CFG["hed_dim"], H)
    wf, bf = init_linear(kg, 2 * H, H)
    return dict(
        pos=sinusoid_table(CFG["max_pos"], H),
        src_emb=init_embedding(kg, CFG["vocab"], H, padding_idx=0),
        enc_layers=[init_fft_block(kg) for _ in range(CFG["enc_layers"])],
        dec_layers=[init_fft_block(kg) for _ in range(CFG["dec_layers"])],
        dur=init_var_predictor(kg),
        pitch=init_var_predictor(kg),
        energy=init_var_predictor(kg),
        pitch_bins=jnp.linspace(-1.0, 1.0, CFG["n_bins"] - 1),
        energy_bins=jnp.linspace(0.0, 2.0, CFG["n_bins"] - 1),
        pitch_emb=init_embedding(kg, CFG["n_bins"], H),
        energy_emb=init_embedding(kg, CFG["n_bins"], H),
        mel_w=wmel, mel_b=bmel.reshape(1, nm),
        hed_proj_w=wp, hed_proj_b=bp.reshape(1, H),
        hed_fuse_wa=wf[:H], hed_fuse_wb=wf[H:], hed_fuse_b=bf.reshape(1, H),
        postnet=init_postnet(kg),
    )


# ----------------------------------------------------------------------------
# Model forward (JAX glue calling the fused Pallas kernels)
# ----------------------------------------------------------------------------
def get_mask_from_lengths(lengths, max_len):
    ids = jnp.arange(max_len)[None, :]
    return ids >= lengths[:, None]        # True == padded


def _mask_layouts(mask_bool):
    """Boolean pad mask (B, T) -> ((B, 1, T) key-pad, (B, T, 1) row-pad) floats."""
    pad_f = mask_bool.astype(jnp.float32)
    return pad_f[:, None, :], pad_f[:, :, None]


def encoder(params, texts, src_mask, bblk):
    B, L = texts.shape
    x = jnp.take(params["src_emb"], texts, axis=0)
    x = x + params["pos"][:L][None]
    kpad3, pad_col = _mask_layouts(src_mask)
    for lp in params["enc_layers"]:
        x = fft_block_apply(lp, x, kpad3, pad_col, bblk)
    return x


def decoder(params, x, mel_mask, bblk):
    B, T, _ = x.shape
    x = x + params["pos"][:T][None]
    kpad3, pad_col = _mask_layouts(mel_mask)
    for lp in params["dec_layers"]:
        x = fft_block_apply(lp, x, kpad3, pad_col, bblk)
    return x, mel_mask


def length_regulate(x, durations, max_len):
    """Expand phoneme-level features to frame level with given durations."""
    B, L, _ = x.shape
    csum = jnp.cumsum(durations, axis=1)                         # (B, L)
    t = jnp.arange(max_len)
    idx = jax.vmap(lambda c: jnp.searchsorted(c, t, side="right"))(csum)
    valid = t[None, :] < csum[:, -1:]
    gathered = jnp.take_along_axis(x, jnp.minimum(idx, L - 1)[..., None], axis=1)
    return jnp.where(valid[..., None], gathered, 0.0)


def variance_adaptor(params, x, src_mask, mel_mask, max_mel_len,
                     p_targets, e_targets, d_targets, mel_lens, bblk):
    B, L, _ = x.shape
    nB = B // bblk
    keep_flat3 = (1.0 - src_mask.astype(jnp.float32)).reshape(nB, 1, bblk * L)

    # Duration + pitch predictors fused into ONE pallas_call (same input x).
    log_d_pred, p_pred = variance_predictors_apply(
        [params["dur"], params["pitch"]], x, keep_flat3, bblk)

    p_idx = jnp.searchsorted(params["pitch_bins"], p_targets)    # torch.bucketize
    x = x + jnp.take(params["pitch_emb"], p_idx, axis=0)

    (e_pred,) = variance_predictors_apply([params["energy"]], x, keep_flat3, bblk)
    e_idx = jnp.searchsorted(params["energy_bins"], e_targets)
    x = x + jnp.take(params["energy_emb"], e_idx, axis=0)

    x = length_regulate(x, d_targets, max_mel_len)
    d_rounded = d_targets
    return x, p_pred, e_pred, log_d_pred, d_rounded, mel_lens, mel_mask


def fastspeech2_forward(params, speakers, texts, src_lens, max_src_len,
                        mel_lens, max_mel_len, p_targets, e_targets, d_targets,
                        hed=None, step=None):
    B = texts.shape[0]
    bblk = _pick_bblk(B)

    src_masks = get_mask_from_lengths(src_lens, max_src_len)
    mel_masks = get_mask_from_lengths(mel_lens, max_mel_len)

    output = encoder(params, texts, src_masks, bblk)
    # speaker_emb is None (multi_speaker = False) -> nothing added.

    (output, p_pred, e_pred, log_d_pred, d_rounded,
     mel_lens, mel_masks) = variance_adaptor(
        params, output, src_masks, mel_masks, max_mel_len,
        p_targets, e_targets, d_targets, mel_lens, bblk)

    if hed is not None:
        hed_t = jnp.transpose(hed, (0, 2, 1))                    # (B, T_mel, 12)
        if step is not None and step < 36000:
            scale = min((step - 16000) / 16000.0, 1.0) if step >= 16000 else 0.0
        else:
            scale = 1.0
    else:
        hed_t = None
        scale = 0.0
    output = hed_fuse_apply(params, output, hed_t, scale, bblk)

    output, mel_masks = decoder(params, output, mel_masks, bblk)
    output, postnet_output = mel_and_postnet(params, output)

    return (output, postnet_output, p_pred, e_pred, log_d_pred, d_rounded,
            src_masks, mel_masks, src_lens, mel_lens)


# ----------------------------------------------------------------------------
# Main
# ----------------------------------------------------------------------------
if __name__ == "__main__":
    params = init_params(0)
    key = jax.random.PRNGKey(0)
    kt, kp, ke, kh = jax.random.split(key, 4)

    B, L = 2, 8
    src_lens_np = np.array([8, 6], dtype=np.int32)
    max_src_len = int(src_lens_np.max())
    pos_mask = (np.arange(L)[None, :] < src_lens_np[:, None])

    texts = jax.random.randint(kt, (B, L), 1, CFG["vocab"], dtype=jnp.int32)
    texts = texts * jnp.asarray(pos_mask, jnp.int32)            # pad token = 0

    # Deterministic durations (zeros on padded phonemes).
    d_np = np.array([[2, 1, 3, 2, 1, 2, 3, 1],
                     [1, 2, 2, 3, 1, 2, 0, 0]], dtype=np.int32)
    mel_lens_np = d_np.sum(axis=1).astype(np.int32)             # [15, 11]
    max_mel_len = int(mel_lens_np.max())                        # 15

    fmask = jnp.asarray(pos_mask, jnp.float32)
    p_targets = jax.random.uniform(kp, (B, L), jnp.float32, -1.0, 1.0) * fmask
    e_targets = jax.random.uniform(ke, (B, L), jnp.float32, 0.0, 2.0) * fmask
    hed = jax.random.normal(kh, (B, CFG["hed_dim"], max_mel_len), jnp.float32)

    outs = fastspeech2_forward(
        params,
        speakers=jnp.zeros((B,), jnp.int32),
        texts=texts,
        src_lens=jnp.asarray(src_lens_np),
        max_src_len=max_src_len,
        mel_lens=jnp.asarray(mel_lens_np),
        max_mel_len=max_mel_len,
        p_targets=p_targets,
        e_targets=e_targets,
        d_targets=jnp.asarray(d_np),
        hed=hed,
        step=None,
    )
    jax.block_until_ready(outs)
    print("KERNEL_OK")
</pallas_src>

<mosaic_0001>
module attributes {stable_mosaic.version = 11 : i64} {
  func.func @kern(%arg0: i32, %arg1: memref<2x8x32xf32, #tpu.memory_space<vmem>>, %arg2: memref<2x1x8xf32, #tpu.memory_space<vmem>>, %arg3: memref<2x8x1xf32, #tpu.memory_space<vmem>>, %arg4: memref<32x96xf32, #tpu.memory_space<vmem>>, %arg5: memref<1x96xf32, #tpu.memory_space<vmem>>, %arg6: memref<32x32xf32, #tpu.memory_space<vmem>>, %arg7: memref<1x32xf32, #tpu.memory_space<vmem>>, %arg8: memref<1x32xf32, #tpu.memory_space<vmem>>, %arg9: memref<1x32xf32, #tpu.memory_space<vmem>>, %arg10: memref<9x32x64xf32, #tpu.memory_space<vmem>>, %arg11: memref<1x64xf32, #tpu.memory_space<vmem>>, %arg12: memref<64x32xf32, #tpu.memory_space<vmem>>, %arg13: memref<1x32xf32, #tpu.memory_space<vmem>>, %arg14: memref<1x32xf32, #tpu.memory_space<vmem>>, %arg15: memref<1x32xf32, #tpu.memory_space<vmem>>, %arg16: memref<2x8x32xf32, #tpu.memory_space<vmem>>) attributes {dimension_semantics = [#tpu.dimension_semantics<parallel>], iteration_bounds = array<i64: 1>, scalar_prefetch = 0 : i64, scratch_operands = 0 : i64, tpu.core_type = #tpu.core_type<tc>, window_params = [{transform_indices = @transform_0, window_bounds = array<i64: 2, 8, 32>}, {transform_indices = @transform_1, window_bounds = array<i64: 2, 1, 8>}, {transform_indices = @transform_2, window_bounds = array<i64: 2, 8, 1>}, {pipeline_mode = #tpu.pipeline_mode<synchronous>, transform_indices = @transform_3, window_bounds = array<i64: 32, 96>}, {pipeline_mode = #tpu.pipeline_mode<synchronous>, transform_indices = @transform_4, window_bounds = array<i64: 1, 96>}, {pipeline_mode = #tpu.pipeline_mode<synchronous>, transform_indices = @transform_5, window_bounds = array<i64: 32, 32>}, {pipeline_mode = #tpu.pipeline_mode<synchronous>, transform_indices = @transform_6, window_bounds = array<i64: 1, 32>}, {pipeline_mode = #tpu.pipeline_mode<synchronous>, transform_indices = @transform_7, window_bounds = array<i64: 1, 32>}, {pipeline_mode = #tpu.pipeline_mode<synchronous>, transform_indices = @transform_8, window_bounds = array<i64: 1, 32>}, {pipeline_mode = #tpu.pipeline_mode<synchronous>, transform_indices = @transform_9, window_bounds = array<i64: 9, 32, 64>}, {pipeline_mode = #tpu.pipeline_mode<synchronous>, transform_indices = @transform_10, window_bounds = array<i64: 1, 64>}, {pipeline_mode = #tpu.pipeline_mode<synchronous>, transform_indices = @transform_11, window_bounds = array<i64: 64, 32>}, {pipeline_mode = #tpu.pipeline_mode<synchronous>, transform_indices = @transform_12, window_bounds = array<i64: 1, 32>}, {pipeline_mode = #tpu.pipeline_mode<synchronous>, transform_indices = @transform_13, window_bounds = array<i64: 1, 32>}, {pipeline_mode = #tpu.pipeline_mode<synchronous>, transform_indices = @transform_14, window_bounds = array<i64: 1, 32>}, {transform_indices = @transform_15, window_bounds = array<i64: 2, 8, 32>}]} {
    %c0 = arith.constant 0 : index
    %c0_0 = arith.constant 0 : index
    %c0_1 = arith.constant 0 : index
    %0 = vector.load %arg1[%c0, %c0_0, %c0_1] : memref<2x8x32xf32, #tpu.memory_space<vmem>>, vector<2x8x32xf32>
    %1 = vector.shape_cast %0 : vector<2x8x32xf32> to vector<16x32xf32>
    %c0_2 = arith.constant 0 : index
    %c0_3 = arith.constant 0 : index
    %c0_4 = arith.constant 0 : index
    %2 = vector.load %arg3[%c0_2, %c0_3, %c0_4] : memref<2x8x1xf32, #tpu.memory_space<vmem>>, vector<2x8x1xf32>
    %3 = vector.shape_cast %2 : vector<2x8x1xf32> to vector<16x1xf32>
    %cst = arith.constant 1.000000e+00 : f32
    %4 = vector.broadcast %cst : f32 to vector<16x1xf32>
    %5 = arith.subf %4, %3 : vector<16x1xf32>
    %c0_5 = arith.constant 0 : index
    %c0_6 = arith.constant 0 : index
    %c0_7 = arith.constant 0 : index
    %6 = vector.load %arg2[%c0_5, %c0_6, %c0_7] : memref<2x1x8xf32, #tpu.memory_space<vmem>>, vector<2x1x8xf32>
    %7 = arith.truncf %1 : vector<16x32xf32> to vector<16x32xbf16>
    %c0_8 = arith.constant 0 : index
    %c0_9 = arith.constant 0 : index
    %8 = vector.load %arg4[%c0_8, %c0_9] : memref<32x96xf32, #tpu.memory_space<vmem>>, vector<32x96xf32>
    %9 = arith.truncf %8 : vector<32x96xf32> to vector<32x96xbf16>
    %cst_10 = arith.constant dense<0.000000e+00> : vector<16x96xf32>
    %10 = tpu.matmul %7, %9, %cst_10 {dimension_numbers = #tpu.dot_dimension_numbers<[1], [0], [0], [1], [0, 0, 1, 1], [], []>} : vector<16x32xbf16>, vector<32x96xbf16>, vector<16x96xf32> -> vector<16x96xf32>
    %c0_11 = arith.constant 0 : index
    %c0_12 = arith.constant 0 : index
    %11 = vector.load %arg5[%c0_11, %c0_12] : memref<1x96xf32, #tpu.memory_space<vmem>>, vector<1x96xf32>
    %12 = vector.broadcast %11 : vector<1x96xf32> to vector<16x96xf32>
    %13 = arith.addf %10, %12 : vector<16x96xf32>
    %c0_13 = arith.constant 0 : index
    %c0_14 = arith.constant 0 : index
    %14 = vector.load %arg6[%c0_13, %c0_14] : memref<32x32xf32, #tpu.memory_space<vmem>>, vector<32x32xf32>
    %15 = arith.truncf %14 : vector<32x32xf32> to vector<32x32xbf16>
    %16 = vector.extract_strided_slice %6 {offsets = [0, 0, 0], sizes = [1, 1, 8], strides = [1, 1, 1]} : vector<2x1x8xf32> to vector<1x1x8xf32>
    %17 = vector.shape_cast %16 : vector<1x1x8xf32> to vector<1x8xf32>
    %18 = vector.extract_strided_slice %13 {offsets = [0, 0], sizes = [8, 96], strides = [1, 1]} : vector<16x96xf32> to vector<8x96xf32>
    %cst_15 = arith.constant 0.000000e+00 : f32
    %19 = vector.broadcast %cst_15 : f32 to vector<8x32xf32>
    %20 = vector.extract_strided_slice %18 {offsets = [0, 0], sizes = [8, 16], strides = [1, 1]} : vector<8x96xf32> to vector<8x16xf32>
    %21 = arith.truncf %20 : vector<8x16xf32> to vector<8x16xbf16>
    %22 = vector.extract_strided_slice %18 {offsets = [0, 32], sizes = [8, 16], strides = [1, 1]} : vector<8x96xf32> to vector<8x16xf32>
    %23 = arith.truncf %22 : vector<8x16xf32> to vector<8x16xbf16>
    %24 = vector.extract_strided_slice %18 {offsets = [0, 64], sizes = [8, 16], strides = [1, 1]} : vector<8x96xf32> to vector<8x16xf32>
    %25 = arith.truncf %24 : vector<8x16xf32> to vector<8x16xbf16>
    %cst_16 = arith.constant dense<0.000000e+00> : vector<8x8xf32>
    %26 = tpu.matmul %21, %23, %cst_16 {dimension_numbers = #tpu.dot_dimension_numbers<[1], [1], [0], [0], [0, 0, 1, 0], [], []>} : vector<8x16xbf16>, vector<8x16xbf16>, vector<8x8xf32> -> vector<8x8xf32>
    %cst_17 = arith.constant 2.500000e-01 : f32
    %27 = vector.broadcast %cst_17 : f32 to vector<8x8xf32>
    %28 = arith.mulf %26, %27 : vector<8x8xf32>
    %cst_18 = arith.constant 5.000000e-01 : f32
    %29 = vector.broadcast %cst_18 : f32 to vector<1x8xf32>
    %30 = arith.cmpf ogt, %17, %29 : vector<1x8xf32>
    %cst_19 = arith.constant -1.000000e+09 : f32
    %31 = vector.shape_cast %30 : vector<1x8xi1> to vector<1x8xi1>
    %32 = vector.broadcast %31 : vector<1x8xi1> to vector<8x8xi1>
    %33 = vector.broadcast %cst_19 : f32 to vector<8x8xf32>
    %34 = arith.select %32, %33, %28 : vector<8x8xi1>, vector<8x8xf32>
    %cst_20 = arith.constant dense<0xFF800000> : vector<8xf32>
    %35 = vector.multi_reduction <maximumf>, %34, %cst_20 [1] : vector<8x8xf32> to vector<8xf32>
    %36 = vector.shape_cast %35 : vector<8xf32> to vector<8x1xf32>
    %37 = vector.broadcast %36 : vector<8x1xf32> to vector<8x8xf32>
    %38 = arith.subf %34, %37 : vector<8x8xf32>
    %39 = math.exp %38 : vector<8x8xf32>
    %cst_21 = arith.constant dense<0.000000e+00> : vector<8xf32>
    %40 = vector.multi_reduction <add>, %39, %cst_21 [1] : vector<8x8xf32> to vector<8xf32>
    %41 = vector.shape_cast %40 : vector<8xf32> to vector<8x1xf32>
    %42 = tpu.reciprocal %41 {approx = true} : vector<8x1xf32> -> vector<8x1xf32>
    %43 = vector.broadcast %42 : vector<8x1xf32> to vector<8x8xf32>
    %44 = arith.mulf %39, %43 : vector<8x8xf32>
    %45 = arith.truncf %44 : vector<8x8xf32> to vector<8x8xbf16>
    %cst_22 = arith.constant dense<0.000000e+00> : vector<8x16xf32>
    %46 = tpu.matmul %45, %25, %cst_22 {dimension_numbers = #tpu.dot_dimension_numbers<[1], [0], [0], [1], [0, 0, 1, 1], [], []>} : vector<8x8xbf16>, vector<8x16xbf16>, vector<8x16xf32> -> vector<8x16xf32>
    %47 = arith.truncf %46 : vector<8x16xf32> to vector<8x16xbf16>
    %48 = vector.extract_strided_slice %15 {offsets = [0, 0], sizes = [16, 32], strides = [1, 1]} : vector<32x32xbf16> to vector<16x32xbf16>
    %cst_23 = arith.constant dense<0.000000e+00> : vector<8x32xf32>
    %49 = tpu.matmul %47, %48, %cst_23 {dimension_numbers = #tpu.dot_dimension_numbers<[1], [0], [0], [1], [0, 0, 1, 1], [], []>} : vector<8x16xbf16>, vector<16x32xbf16>, vector<8x32xf32> -> vector<8x32xf32>
    %50 = arith.addf %19, %49 : vector<8x32xf32>
    %51 = vector.extract_strided_slice %18 {offsets = [0, 16], sizes = [8, 16], strides = [1, 1]} : vector<8x96xf32> to vector<8x16xf32>
    %52 = arith.truncf %51 : vector<8x16xf32> to vector<8x16xbf16>
    %53 = vector.extract_strided_slice %18 {offsets = [0, 48], sizes = [8, 16], strides = [1, 1]} : vector<8x96xf32> to vector<8x16xf32>
    %54 = arith.truncf %53 : vector<8x16xf32> to vector<8x16xbf16>
    %55 = vector.extract_strided_slice %18 {offsets = [0, 80], sizes = [8, 16], strides = [1, 1]} : vector<8x96xf32> to vector<8x16xf32>
    %56 = arith.truncf %55 : vector<8x16xf32> to vector<8x16xbf16>
    %cst_24 = arith.constant dense<0.000000e+00> : vector<8x8xf32>
    %57 = tpu.matmul %52, %54, %cst_24 {dimension_numbers = #tpu.dot_dimension_numbers<[1], [1], [0], [0], [0, 0, 1, 0], [], []>} : vector<8x16xbf16>, vector<8x16xbf16>, vector<8x8xf32> -> vector<8x8xf32>
    %cst_25 = arith.constant 2.500000e-01 : f32
    %58 = vector.broadcast %cst_25 : f32 to vector<8x8xf32>
    %59 = arith.mulf %57, %58 : vector<8x8xf32>
    %cst_26 = arith.constant 5.000000e-01 : f32
    %60 = vector.broadcast %cst_26 : f32 to vector<1x8xf32>
    %61 = arith.cmpf ogt, %17, %60 : vector<1x8xf32>
    %cst_27 = arith.constant -1.000000e+09 : f32
    %62 = vector.shape_cast %61 : vector<1x8xi1> to vector<1x8xi1>
    %63 = vector.broadcast %62 : vector<1x8xi1> to vector<8x8xi1>
    %64 = vector.broadcast %cst_27 : f32 to vector<8x8xf32>
    %65 = arith.select %63, %64, %59 : vector<8x8xi1>, vector<8x8xf32>
    %cst_28 = arith.constant dense<0xFF800000> : vector<8xf32>
    %66 = vector.multi_reduction <maximumf>, %65, %cst_28 [1] : vector<8x8xf32> to vector<8xf32>
    %67 = vector.shape_cast %66 : vector<8xf32> to vector<8x1xf32>
    %68 = vector.broadcast %67 : vector<8x1xf32> to vector<8x8xf32>
    %69 = arith.subf %65, %68 : vector<8x8xf32>
    %70 = math.exp %69 : vector<8x8xf32>
    %cst_29 = arith.constant dense<0.000000e+00> : vector<8xf32>
    %71 = vector.multi_reduction <add>, %70, %cst_29 [1] : vector<8x8xf32> to vector<8xf32>
    %72 = vector.shape_cast %71 : vector<8xf32> to vector<8x1xf32>
    %73 = tpu.reciprocal %72 {approx = true} : vector<8x1xf32> -> vector<8x1xf32>
    %74 = vector.broadcast %73 : vector<8x1xf32> to vector<8x8xf32>
    %75 = arith.mulf %70, %74 : vector<8x8xf32>
    %76 = arith.truncf %75 : vector<8x8xf32> to vector<8x8xbf16>
    %cst_30 = arith.constant dense<0.000000e+00> : vector<8x16xf32>
    %77 = tpu.matmul %76, %56, %cst_30 {dimension_numbers = #tpu.dot_dimension_numbers<[1], [0], [0], [1], [0, 0, 1, 1], [], []>} : vector<8x8xbf16>, vector<8x16xbf16>, vector<8x16xf32> -> vector<8x16xf32>
    %78 = arith.truncf %77 : vector<8x16xf32> to vector<8x16xbf16>
    %79 = vector.extract_strided_slice %15 {offsets = [16, 0], sizes = [16, 32], strides = [1, 1]} : vector<32x32xbf16> to vector<16x32xbf16>
    %cst_31 = arith.constant dense<0.000000e+00> : vector<8x32xf32>
    %80 = tpu.matmul %78, %79, %cst_31 {dimension_numbers = #tpu.dot_dimension_numbers<[1], [0], [0], [1], [0, 0, 1, 1], [], []>} : vector<8x16xbf16>, vector<16x32xbf16>, vector<8x32xf32> -> vector<8x32xf32>
    %81 = arith.addf %50, %80 : vector<8x32xf32>
    %82 = vector.extract_strided_slice %6 {offsets = [1, 0, 0], sizes = [1, 1, 8], strides = [1, 1, 1]} : vector<2x1x8xf32> to vector<1x1x8xf32>
    %83 = vector.shape_cast %82 : vector<1x1x8xf32> to vector<1x8xf32>
    %84 = vector.extract_strided_slice %13 {offsets = [8, 0], sizes = [8, 96], strides = [1, 1]} : vector<16x96xf32> to vector<8x96xf32>
    %cst_32 = arith.constant 0.000000e+00 : f32
    %85 = vector.broadcast %cst_32 : f32 to vector<8x32xf32>
    %86 = vector.extract_strided_slice %84 {offsets = [0, 0], sizes = [8, 16], strides = [1, 1]} : vector<8x96xf32> to vector<8x16xf32>
    %87 = arith.truncf %86 : vector<8x16xf32> to vector<8x16xbf16>
    %88 = vector.extract_strided_slice %84 {offsets = [0, 32], sizes = [8, 16], strides = [1, 1]} : vector<8x96xf32> to vector<8x16xf32>
    %89 = arith.truncf %88 : vector<8x16xf32> to vector<8x16xbf16>
    %90 = vector.extract_strided_slice %84 {offsets = [0, 64], sizes = [8, 16], strides = [1, 1]} : vector<8x96xf32> to vector<8x16xf32>
    %91 = arith.truncf %90 : vector<8x16xf32> to vector<8x16xbf16>
    %cst_33 = arith.constant dense<0.000000e+00> : vector<8x8xf32>
    %92 = tpu.matmul %87, %89, %cst_33 {dimension_numbers = #tpu.dot_dimension_numbers<[1], [1], [0], [0], [0, 0, 1, 0], [], []>} : vector<8x16xbf16>, vector<8x16xbf16>, vector<8x8xf32> -> vector<8x8xf32>
    %cst_34 = arith.constant 2.500000e-01 : f32
    %93 = vector.broadcast %cst_34 : f32 to vector<8x8xf32>
    %94 = arith.mulf %92, %93 : vector<8x8xf32>
    %cst_35 = arith.constant 5.000000e-01 : f32
    %95 = vector.broadcast %cst_35 : f32 to vector<1x8xf32>
    %96 = arith.cmpf ogt, %83, %95 : vector<1x8xf32>
    %cst_36 = arith.constant -1.000000e+09 : f32
    %97 = vector.shape_cast %96 : vector<1x8xi1> to vector<1x8xi1>
    %98 = vector.broadcast %97 : vector<1x8xi1> to vector<8x8xi1>
    %99 = vector.broadcast %cst_36 : f32 to vector<8x8xf32>
    %100 = arith.select %98, %99, %94 : vector<8x8xi1>, vector<8x8xf32>
    %cst_37 = arith.constant dense<0xFF800000> : vector<8xf32>
    %101 = vector.multi_reduction <maximumf>, %100, %cst_37 [1] : vector<8x8xf32> to vector<8xf32>
    %102 = vector.shape_cast %101 : vector<8xf32> to vector<8x1xf32>
    %103 = vector.broadcast %102 : vector<8x1xf32> to vector<8x8xf32>
    %104 = arith.subf %100, %103 : vector<8x8xf32>
    %105 = math.exp %104 : vector<8x8xf32>
    %cst_38 = arith.constant dense<0.000000e+00> : vector<8xf32>
    %106 = vector.multi_reduction <add>, %105, %cst_38 [1] : vector<8x8xf32> to vector<8xf32>
    %107 = vector.shape_cast %106 : vector<8xf32> to vector<8x1xf32>
    %108 = tpu.reciprocal %107 {approx = true} : vector<8x1xf32> -> vector<8x1xf32>
    %109 = vector.broadcast %108 : vector<8x1xf32> to vector<8x8xf32>
    %110 = arith.mulf %105, %109 : vector<8x8xf32>
    %111 = arith.truncf %110 : vector<8x8xf32> to vector<8x8xbf16>
    %cst_39 = arith.constant dense<0.000000e+00> : vector<8x16xf32>
    %112 = tpu.matmul %111, %91, %cst_39 {dimension_numbers = #tpu.dot_dimension_numbers<[1], [0], [0], [1], [0, 0, 1, 1], [], []>} : vector<8x8xbf16>, vector<8x16xbf16>, vector<8x16xf32> -> vector<8x16xf32>
    %113 = arith.truncf %112 : vector<8x16xf32> to vector<8x16xbf16>
    %114 = vector.extract_strided_slice %15 {offsets = [0, 0], sizes = [16, 32], strides = [1, 1]} : vector<32x32xbf16> to vector<16x32xbf16>
    %cst_40 = arith.constant dense<0.000000e+00> : vector<8x32xf32>
    %115 = tpu.matmul %113, %114, %cst_40 {dimension_numbers = #tpu.dot_dimension_numbers<[1], [0], [0], [1], [0, 0, 1, 1], [], []>} : vector<8x16xbf16>, vector<16x32xbf16>, vector<8x32xf32> -> vector<8x32xf32>
    %116 = arith.addf %85, %115 : vector<8x32xf32>
    %117 = vector.extract_strided_slice %84 {offsets = [0, 16], sizes = [8, 16], strides = [1, 1]} : vector<8x96xf32> to vector<8x16xf32>
    %118 = arith.truncf %117 : vector<8x16xf32> to vector<8x16xbf16>
    %119 = vector.extract_strided_slice %84 {offsets = [0, 48], sizes = [8, 16], strides = [1, 1]} : vector<8x96xf32> to vector<8x16xf32>
    %120 = arith.truncf %119 : vector<8x16xf32> to vector<8x16xbf16>
    %121 = vector.extract_strided_slice %84 {offsets = [0, 80], sizes = [8, 16], strides = [1, 1]} : vector<8x96xf32> to vector<8x16xf32>
    %122 = arith.truncf %121 : vector<8x16xf32> to vector<8x16xbf16>
    %cst_41 = arith.constant dense<0.000000e+00> : vector<8x8xf32>
    %123 = tpu.matmul %118, %120, %cst_41 {dimension_numbers = #tpu.dot_dimension_numbers<[1], [1], [0], [0], [0, 0, 1, 0], [], []>} : vector<8x16xbf16>, vector<8x16xbf16>, vector<8x8xf32> -> vector<8x8xf32>
    %cst_42 = arith.constant 2.500000e-01 : f32
    %124 = vector.broadcast %cst_42 : f32 to vector<8x8xf32>
    %125 = arith.mulf %123, %124 : vector<8x8xf32>
    %cst_43 = arith.constant 5.000000e-01 : f32
    %126 = vector.broadcast %cst_43 : f32 to vector<1x8xf32>
    %127 = arith.cmpf ogt, %83, %126 : vector<1x8xf32>
    %cst_44 = arith.constant -1.000000e+09 : f32
    %128 = vector.shape_cast %127 : vector<1x8xi1> to vector<1x8xi1>
    %129 = vector.broadcast %128 : vector<1x8xi1> to vector<8x8xi1>
    %130 = vector.broadcast %cst_44 : f32 to vector<8x8xf32>
    %131 = arith.select %129, %130, %125 : vector<8x8xi1>, vector<8x8xf32>
    %cst_45 = arith.constant dense<0xFF800000> : vector<8xf32>
    %132 = vector.multi_reduction <maximumf>, %131, %cst_45 [1] : vector<8x8xf32> to vector<8xf32>
    %133 = vector.shape_cast %132 : vector<8xf32> to vector<8x1xf32>
    %134 = vector.broadcast %133 : vector<8x1xf32> to vector<8x8xf32>
    %135 = arith.subf %131, %134 : vector<8x8xf32>
    %136 = math.exp %135 : vector<8x8xf32>
    %cst_46 = arith.constant dense<0.000000e+00> : vector<8xf32>
    %137 = vector.multi_reduction <add>, %136, %cst_46 [1] : vector<8x8xf32> to vector<8xf32>
    %138 = vector.shape_cast %137 : vector<8xf32> to vector<8x1xf32>
    %139 = tpu.reciprocal %138 {approx = true} : vector<8x1xf32> -> vector<8x1xf32>
    %140 = vector.broadcast %139 : vector<8x1xf32> to vector<8x8xf32>
    %141 = arith.mulf %136, %140 : vector<8x8xf32>
    %142 = arith.truncf %141 : vector<8x8xf32> to vector<8x8xbf16>
    %cst_47 = arith.constant dense<0.000000e+00> : vector<8x16xf32>
    %143 = tpu.matmul %142, %122, %cst_47 {dimension_numbers = #tpu.dot_dimension_numbers<[1], [0], [0], [1], [0, 0, 1, 1], [], []>} : vector<8x8xbf16>, vector<8x16xbf16>, vector<8x16xf32> -> vector<8x16xf32>
    %144 = arith.truncf %143 : vector<8x16xf32> to vector<8x16xbf16>
    %145 = vector.extract_strided_slice %15 {offsets = [16, 0], sizes = [16, 32], strides = [1, 1]} : vector<32x32xbf16> to vector<16x32xbf16>
    %cst_48 = arith.constant dense<0.000000e+00> : vector<8x32xf32>
    %146 = tpu.matmul %144, %145, %cst_48 {dimension_numbers = #tpu.dot_dimension_numbers<[1], [0], [0], [1], [0, 0, 1, 1], [], []>} : vector<8x16xbf16>, vector<16x32xbf16>, vector<8x32xf32> -> vector<8x32xf32>
    %147 = arith.addf %116, %146 : vector<8x32xf32>
    %148 = tpu.concatenate %81, %147 in 0 : vector<8x32xf32>, vector<8x32xf32> -> vector<16x32xf32>
    %c0_49 = arith.constant 0 : index
    %c0_50 = arith.constant 0 : index
    %149 = vector.load %arg7[%c0_49, %c0_50] : memref<1x32xf32, #tpu.memory_space<vmem>>, vector<1x32xf32>
    %150 = vector.broadcast %149 : vector<1x32xf32> to vector<16x32xf32>
    %151 = arith.addf %148, %150 : vector<16x32xf32>
    %152 = arith.addf %151, %1 : vector<16x32xf32>
    %c0_51 = arith.constant 0 : index
    %c0_52 = arith.constant 0 : index
    %153 = vector.load %arg8[%c0_51, %c0_52] : memref<1x32xf32, #tpu.memory_space<vmem>>, vector<1x32xf32>
    %c0_53 = arith.constant 0 : index
    %c0_54 = arith.constant 0 : index
    %154 = vector.load %arg9[%c0_53, %c0_54] : memref<1x32xf32, #tpu.memory_space<vmem>>, vector<1x32xf32>
    %cst_55 = arith.constant dense<0.000000e+00> : vector<16xf32>
    %155 = vector.multi_reduction <add>, %152, %cst_55 [1] : vector<16x32xf32> to vector<16xf32>
    %156 = vector.shape_cast %155 : vector<16xf32> to vector<16x1xf32>
    %cst_56 = arith.constant 3.200000e+01 : f32
    %157 = vector.broadcast %cst_56 : f32 to vector<16x1xf32>
    %158 = arith.divf %156, %157 : vector<16x1xf32>
    %159 = vector.broadcast %158 : vector<16x1xf32> to vector<16x32xf32>
    %160 = arith.subf %152, %159 : vector<16x32xf32>
    %161 = arith.mulf %160, %160 : vector<16x32xf32>
    %cst_57 = arith.constant dense<0.000000e+00> : vector<16xf32>
    %162 = vector.multi_reduction <add>, %161, %cst_57 [1] : vector<16x32xf32> to vector<16xf32>
    %163 = vector.shape_cast %162 : vector<16xf32> to vector<16x1xf32>
    %cst_58 = arith.constant 3.200000e+01 : f32
    %164 = vector.broadcast %cst_58 : f32 to vector<16x1xf32>
    %165 = arith.divf %163, %164 : vector<16x1xf32>
    %166 = vector.broadcast %158 : vector<16x1xf32> to vector<16x32xf32>
    %167 = arith.subf %152, %166 : vector<16x32xf32>
    %cst_59 = arith.constant 9.99999974E-6 : f32
    %168 = vector.broadcast %cst_59 : f32 to vector<16x1xf32>
    %169 = arith.addf %165, %168 : vector<16x1xf32>
    %170 = math.rsqrt %169 : vector<16x1xf32>
    %171 = vector.broadcast %170 : vector<16x1xf32> to vector<16x32xf32>
    %172 = arith.mulf %167, %171 : vector<16x32xf32>
    %173 = vector.broadcast %153 : vector<1x32xf32> to vector<16x32xf32>
    %174 = arith.mulf %172, %173 : vector<16x32xf32>
    %175 = vector.broadcast %154 : vector<1x32xf32> to vector<16x32xf32>
    %176 = arith.addf %174, %175 : vector<16x32xf32>
    %177 = vector.broadcast %5 : vector<16x1xf32> to vector<16x32xf32>
    %178 = arith.mulf %176, %177 : vector<16x32xf32>
    %179 = arith.truncf %178 : vector<16x32xf32> to vector<16x32xbf16>
    %180 = tpu.iota {dimensions = array<i32: 1>} : vector<2x8x1xi32>
    %181 = vector.shape_cast %180 : vector<2x8x1xi32> to vector<16x1xi32>
    %cst_60 = arith.constant 0.000000e+00 : f32
    %182 = vector.broadcast %cst_60 : f32 to vector<16x64xf32>
    %c0_61 = arith.constant 0 : index
    %c0_62 = arith.constant 0 : index
    %c0_63 = arith.constant 0 : index
    %183 = vector.load %arg10[%c0_61, %c0_62, %c0_63] : memref<9x32x64xf32, #tpu.memory_space<vmem>>, vector<1x32x64xf32>
    %184 = vector.shape_cast %183 : vector<1x32x64xf32> to vector<32x64xf32>
    %185 = arith.truncf %184 : vector<32x64xf32> to vector<32x64xbf16>
    %cst_64 = arith.constant dense<0.000000e+00> : vector<16x64xf32>
    %186 = tpu.matmul %179, %185, %cst_64 {dimension_numbers = #tpu.dot_dimension_numbers<[1], [0], [0], [1], [0, 0, 1, 1], [], []>} : vector<16x32xbf16>, vector<32x64xbf16>, vector<16x64xf32> -> vector<16x64xf32>
    %cst_65 = arith.constant 0.000000e+00 : f32
    %187 = vector.broadcast %cst_65 : f32 to vector<4x64xf32>
    %188 = vector.extract_strided_slice %186 {offsets = [0, 0], sizes = [12, 64], strides = [1, 1]} : vector<16x64xf32> to vector<12x64xf32>
    %189 = tpu.concatenate %187, %188 in 0 : vector<4x64xf32>, vector<12x64xf32> -> vector<16x64xf32>
    %c-4_i32 = arith.constant -4 : i32
    %190 = vector.broadcast %c-4_i32 : i32 to vector<16x1xi32>
    %191 = arith.addi %181, %190 : vector<16x1xi32>
    %c0_i32 = arith.constant 0 : i32
    %192 = vector.broadcast %c0_i32 : i32 to vector<16x1xi32>
    %193 = arith.cmpi sge, %191, %192 : vector<16x1xi32>
    %c-4_i32_66 = arith.constant -4 : i32
    %194 = vector.broadcast %c-4_i32_66 : i32 to vector<16x1xi32>
    %195 = arith.addi %181, %194 : vector<16x1xi32>
    %c8_i32 = arith.constant 8 : i32
    %196 = vector.broadcast %c8_i32 : i32 to vector<16x1xi32>
    %197 = arith.cmpi slt, %195, %196 : vector<16x1xi32>
    %198 = arith.andi %193, %197 : vector<16x1xi1>
    %cst_67 = arith.constant 0.000000e+00 : f32
    %199 = vector.shape_cast %198 : vector<16x1xi1> to vector<16x1xi1>
    %200 = vector.broadcast %199 : vector<16x1xi1> to vector<16x64xi1>
    %201 = vector.broadcast %cst_67 : f32 to vector<16x64xf32>
    %202 = arith.select %200, %189, %201 : vector<16x64xi1>, vector<16x64xf32>
    %203 = arith.addf %182, %202 : vector<16x64xf32>
    %c1 = arith.constant 1 : index
    %c0_68 = arith.constant 0 : index
    %c0_69 = arith.constant 0 : index
    %204 = vector.load %arg10[%c1, %c0_68, %c0_69] : memref<9x32x64xf32, #tpu.memory_space<vmem>>, vector<1x32x64xf32>
    %205 = vector.shape_cast %204 : vector<1x32x64xf32> to vector<32x64xf32>
    %206 = arith.truncf %205 : vector<32x64xf32> to vector<32x64xbf16>
    %cst_70 = arith.constant dense<0.000000e+00> : vector<16x64xf32>
    %207 = tpu.matmul %179, %206, %cst_70 {dimension_numbers = #tpu.dot_dimension_numbers<[1], [0], [0], [1], [0, 0, 1, 1], [], []>} : vector<16x32xbf16>, vector<32x64xbf16>, vector<16x64xf32> -> vector<16x64xf32>
    %cst_71 = arith.constant 0.000000e+00 : f32
    %208 = vector.broadcast %cst_71 : f32 to vector<3x64xf32>
    %209 = vector.extract_strided_slice %207 {offsets = [0, 0], sizes = [13, 64], strides = [1, 1]} : vector<16x64xf32> to vector<13x64xf32>
    %210 = tpu.concatenate %208, %209 in 0 : vector<3x64xf32>, vector<13x64xf32> -> vector<16x64xf32>
    %c-3_i32 = arith.constant -3 : i32
    %211 = vector.broadcast %c-3_i32 : i32 to vector<16x1xi32>
    %212 = arith.addi %181, %211 : vector<16x1xi32>
    %c0_i32_72 = arith.constant 0 : i32
    %213 = vector.broadcast %c0_i32_72 : i32 to vector<16x1xi32>
    %214 = arith.cmpi sge, %212, %213 : vector<16x1xi32>
    %c-3_i32_73 = arith.constant -3 : i32
    %215 = vector.broadcast %c-3_i32_73 : i32 to vector<16x1xi32>
    %216 = arith.addi %181, %215 : vector<16x1xi32>
    %c8_i32_74 = arith.constant 8 : i32
    %217 = vector.broadcast %c8_i32_74 : i32 to vector<16x1xi32>
    %218 = arith.cmpi slt, %216, %217 : vector<16x1xi32>
    %219 = arith.andi %214, %218 : vector<16x1xi1>
    %cst_75 = arith.constant 0.000000e+00 : f32
    %220 = vector.shape_cast %219 : vector<16x1xi1> to vector<16x1xi1>
    %221 = vector.broadcast %220 : vector<16x1xi1> to vector<16x64xi1>
    %222 = vector.broadcast %cst_75 : f32 to vector<16x64xf32>
    %223 = arith.select %221, %210, %222 : vector<16x64xi1>, vector<16x64xf32>
    %224 = arith.addf %203, %223 : vector<16x64xf32>
    %c2 = arith.constant 2 : index
    %c0_76 = arith.constant 0 : index
    %c0_77 = arith.constant 0 : index
    %225 = vector.load %arg10[%c2, %c0_76, %c0_77] : memref<9x32x64xf32, #tpu.memory_space<vmem>>, vector<1x32x64xf32>
    %226 = vector.shape_cast %225 : vector<1x32x64xf32> to vector<32x64xf32>
    %227 = arith.truncf %226 : vector<32x64xf32> to vector<32x64xbf16>
    %cst_78 = arith.constant dense<0.000000e+00> : vector<16x64xf32>
    %228 = tpu.matmul %179, %227, %cst_78 {dimension_numbers = #tpu.dot_dimension_numbers<[1], [0], [0], [1], [0, 0, 1, 1], [], []>} : vector<16x32xbf16>, vector<32x64xbf16>, vector<16x64xf32> -> vector<16x64xf32>
    %cst_79 = arith.constant 0.000000e+00 : f32
    %229 = vector.broadcast %cst_79 : f32 to vector<2x64xf32>
    %230 = vector.extract_strided_slice %228 {offsets = [0, 0], sizes = [14, 64], strides = [1, 1]} : vector<16x64xf32> to vector<14x64xf32>
    %231 = tpu.concatenate %229, %230 in 0 : vector<2x64xf32>, vector<14x64xf32> -> vector<16x64xf32>
    %c-2_i32 = arith.constant -2 : i32
    %232 = vector.broadcast %c-2_i32 : i32 to vector<16x1xi32>
    %233 = arith.addi %181, %232 : vector<16x1xi32>
    %c0_i32_80 = arith.constant 0 : i32
    %234 = vector.broadcast %c0_i32_80 : i32 to vector<16x1xi32>
    %235 = arith.cmpi sge, %233, %234 : vector<16x1xi32>
    %c-2_i32_81 = arith.constant -2 : i32
    %236 = vector.broadcast %c-2_i32_81 : i32 to vector<16x1xi32>
    %237 = arith.addi %181, %236 : vector<16x1xi32>
    %c8_i32_82 = arith.constant 8 : i32
    %238 = vector.broadcast %c8_i32_82 : i32 to vector<16x1xi32>
    %239 = arith.cmpi slt, %237, %238 : vector<16x1xi32>
    %240 = arith.andi %235, %239 : vector<16x1xi1>
    %cst_83 = arith.constant 0.000000e+00 : f32
    %241 = vector.shape_cast %240 : vector<16x1xi1> to vector<16x1xi1>
    %242 = vector.broadcast %241 : vector<16x1xi1> to vector<16x64xi1>
    %243 = vector.broadcast %cst_83 : f32 to vector<16x64xf32>
    %244 = arith.select %242, %231, %243 : vector<16x64xi1>, vector<16x64xf32>
    %245 = arith.addf %224, %244 : vector<16x64xf32>
    %c3 = arith.constant 3 : index
    %c0_84 = arith.constant 0 : index
    %c0_85 = arith.constant 0 : index
    %246 = vector.load %arg10[%c3, %c0_84, %c0_85] : memref<9x32x64xf32, #tpu.memory_space<vmem>>, vector<1x32x64xf32>
    %247 = vector.shape_cast %246 : vector<1x32x64xf32> to vector<32x64xf32>
    %248 = arith.truncf %247 : vector<32x64xf32> to vector<32x64xbf16>
    %cst_86 = arith.constant dense<0.000000e+00> : vector<16x64xf32>
    %249 = tpu.matmul %179, %248, %cst_86 {dimension_numbers = #tpu.dot_dimension_numbers<[1], [0], [0], [1], [0, 0, 1, 1], [], []>} : vector<16x32xbf16>, vector<32x64xbf16>, vector<16x64xf32> -> vector<16x64xf32>
    %cst_87 = arith.constant 0.000000e+00 : f32
    %250 = vector.broadcast %cst_87 : f32 to vector<1x64xf32>
    %251 = vector.extract_strided_slice %249 {offsets = [0, 0], sizes = [15, 64], strides = [1, 1]} : vector<16x64xf32> to vector<15x64xf32>
    %252 = tpu.concatenate %250, %251 in 0 : vector<1x64xf32>, vector<15x64xf32> -> vector<16x64xf32>
    %c-1_i32 = arith.constant -1 : i32
    %253 = vector.broadcast %c-1_i32 : i32 to vector<16x1xi32>
    %254 = arith.addi %181, %253 : vector<16x1xi32>
    %c0_i32_88 = arith.constant 0 : i32
    %255 = vector.broadcast %c0_i32_88 : i32 to vector<16x1xi32>
    %256 = arith.cmpi sge, %254, %255 : vector<16x1xi32>
    %c-1_i32_89 = arith.constant -1 : i32
    %257 = vector.broadcast %c-1_i32_89 : i32 to vector<16x1xi32>
    %258 = arith.addi %181, %257 : vector<16x1xi32>
    %c8_i32_90 = arith.constant 8 : i32
    %259 = vector.broadcast %c8_i32_90 : i32 to vector<16x1xi32>
    %260 = arith.cmpi slt, %258, %259 : vector<16x1xi32>
    %261 = arith.andi %256, %260 : vector<16x1xi1>
    %cst_91 = arith.constant 0.000000e+00 : f32
    %262 = vector.shape_cast %261 : vector<16x1xi1> to vector<16x1xi1>
    %263 = vector.broadcast %262 : vector<16x1xi1> to vector<16x64xi1>
    %264 = vector.broadcast %cst_91 : f32 to vector<16x64xf32>
    %265 = arith.select %263, %252, %264 : vector<16x64xi1>, vector<16x64xf32>
    %266 = arith.addf %245, %265 : vector<16x64xf32>
    %c4 = arith.constant 4 : index
    %c0_92 = arith.constant 0 : index
    %c0_93 = arith.constant 0 : index
    %267 = vector.load %arg10[%c4, %c0_92, %c0_93] : memref<9x32x64xf32, #tpu.memory_space<vmem>>, vector<1x32x64xf32>
    %268 = vector.shape_cast %267 : vector<1x32x64xf32> to vector<32x64xf32>
    %269 = arith.truncf %268 : vector<32x64xf32> to vector<32x64xbf16>
    %cst_94 = arith.constant dense<0.000000e+00> : vector<16x64xf32>
    %270 = tpu.matmul %179, %269, %cst_94 {dimension_numbers = #tpu.dot_dimension_numbers<[1], [0], [0], [1], [0, 0, 1, 1], [], []>} : vector<16x32xbf16>, vector<32x64xbf16>, vector<16x64xf32> -> vector<16x64xf32>
    %c0_i32_95 = arith.constant 0 : i32
    %271 = vector.broadcast %c0_i32_95 : i32 to vector<16x1xi32>
    %272 = arith.addi %181, %271 : vector<16x1xi32>
    %c0_i32_96 = arith.constant 0 : i32
    %273 = vector.broadcast %c0_i32_96 : i32 to vector<16x1xi32>
    %274 = arith.cmpi sge, %272, %273 : vector<16x1xi32>
    %c0_i32_97 = arith.constant 0 : i32
    %275 = vector.broadcast %c0_i32_97 : i32 to vector<16x1xi32>
    %276 = arith.addi %181, %275 : vector<16x1xi32>
    %c8_i32_98 = arith.constant 8 : i32
    %277 = vector.broadcast %c8_i32_98 : i32 to vector<16x1xi32>
    %278 = arith.cmpi slt, %276, %277 : vector<16x1xi32>
    %279 = arith.andi %274, %278 : vector<16x1xi1>
    %cst_99 = arith.constant 0.000000e+00 : f32
    %280 = vector.shape_cast %279 : vector<16x1xi1> to vector<16x1xi1>
    %281 = vector.broadcast %280 : vector<16x1xi1> to vector<16x64xi1>
    %282 = vector.broadcast %cst_99 : f32 to vector<16x64xf32>
    %283 = arith.select %281, %270, %282 : vector<16x64xi1>, vector<16x64xf32>
    %284 = arith.addf %266, %283 : vector<16x64xf32>
    %c5 = arith.constant 5 : index
    %c0_100 = arith.constant 0 : index
    %c0_101 = arith.constant 0 : index
    %285 = vector.load %arg10[%c5, %c0_100, %c0_101] : memref<9x32x64xf32, #tpu.memory_space<vmem>>, vector<1x32x64xf32>
    %286 = vector.shape_cast %285 : vector<1x32x64xf32> to vector<32x64xf32>
    %287 = arith.truncf %286 : vector<32x64xf32> to vector<32x64xbf16>
    %cst_102 = arith.constant dense<0.000000e+00> : vector<16x64xf32>
    %288 = tpu.matmul %179, %287, %cst_102 {dimension_numbers = #tpu.dot_dimension_numbers<[1], [0], [0], [1], [0, 0, 1, 1], [], []>} : vector<16x32xbf16>, vector<32x64xbf16>, vector<16x64xf32> -> vector<16x64xf32>
    %289 = vector.extract_strided_slice %288 {offsets = [1, 0], sizes = [15, 64], strides = [1, 1]} : vector<16x64xf32> to vector<15x64xf32>
    %cst_103 = arith.constant 0.000000e+00 : f32
    %290 = vector.broadcast %cst_103 : f32 to vector<1x64xf32>
    %291 = tpu.concatenate %289, %290 in 0 : vector<15x64xf32>, vector<1x64xf32> -> vector<16x64xf32>
    %c1_i32 = arith.constant 1 : i32
    %292 = vector.broadcast %c1_i32 : i32 to vector<16x1xi32>
    %293 = arith.addi %181, %292 : vector<16x1xi32>
    %c0_i32_104 = arith.constant 0 : i32
    %294 = vector.broadcast %c0_i32_104 : i32 to vector<16x1xi32>
    %295 = arith.cmpi sge, %293, %294 : vector<16x1xi32>
    %c1_i32_105 = arith.constant 1 : i32
    %296 = vector.broadcast %c1_i32_105 : i32 to vector<16x1xi32>
    %297 = arith.addi %181, %296 : vector<16x1xi32>
    %c8_i32_106 = arith.constant 8 : i32
    %298 = vector.broadcast %c8_i32_106 : i32 to vector<16x1xi32>
    %299 = arith.cmpi slt, %297, %298 : vector<16x1xi32>
    %300 = arith.andi %295, %299 : vector<16x1xi1>
    %cst_107 = arith.constant 0.000000e+00 : f32
    %301 = vector.shape_cast %300 : vector<16x1xi1> to vector<16x1xi1>
    %302 = vector.broadcast %301 : vector<16x1xi1> to vector<16x64xi1>
    %303 = vector.broadcast %cst_107 : f32 to vector<16x64xf32>
    %304 = arith.select %302, %291, %303 : vector<16x64xi1>, vector<16x64xf32>
    %305 = arith.addf %284, %304 : vector<16x64xf32>
    %c6 = arith.constant 6 : index
    %c0_108 = arith.constant 0 : index
    %c0_109 = arith.constant 0 : index
    %306 = vector.load %arg10[%c6, %c0_108, %c0_109] : memref<9x32x64xf32, #tpu.memory_space<vmem>>, vector<1x32x64xf32>
    %307 = vector.shape_cast %306 : vector<1x32x64xf32> to vector<32x64xf32>
    %308 = arith.truncf %307 : vector<32x64xf32> to vector<32x64xbf16>
    %cst_110 = arith.constant dense<0.000000e+00> : vector<16x64xf32>
    %309 = tpu.matmul %179, %308, %cst_110 {dimension_numbers = #tpu.dot_dimension_numbers<[1], [0], [0], [1], [0, 0, 1, 1], [], []>} : vector<16x32xbf16>, vector<32x64xbf16>, vector<16x64xf32> -> vector<16x64xf32>
    %310 = vector.extract_strided_slice %309 {offsets = [2, 0], sizes = [14, 64], strides = [1, 1]} : vector<16x64xf32> to vector<14x64xf32>
    %cst_111 = arith.constant 0.000000e+00 : f32
    %311 = vector.broadcast %cst_111 : f32 to vector<2x64xf32>
    %312 = tpu.concatenate %310, %311 in 0 : vector<14x64xf32>, vector<2x64xf32> -> vector<16x64xf32>
    %c2_i32 = arith.constant 2 : i32
    %313 = vector.broadcast %c2_i32 : i32 to vector<16x1xi32>
    %314 = arith.addi %181, %313 : vector<16x1xi32>
    %c0_i32_112 = arith.constant 0 : i32
    %315 = vector.broadcast %c0_i32_112 : i32 to vector<16x1xi32>
    %316 = arith.cmpi sge, %314, %315 : vector<16x1xi32>
    %c2_i32_113 = arith.constant 2 : i32
    %317 = vector.broadcast %c2_i32_113 : i32 to vector<16x1xi32>
    %318 = arith.addi %181, %317 : vector<16x1xi32>
    %c8_i32_114 = arith.constant 8 : i32
    %319 = vector.broadcast %c8_i32_114 : i32 to vector<16x1xi32>
    %320 = arith.cmpi slt, %318, %319 : vector<16x1xi32>
    %321 = arith.andi %316, %320 : vector<16x1xi1>
    %cst_115 = arith.constant 0.000000e+00 : f32
    %322 = vector.shape_cast %321 : vector<16x1xi1> to vector<16x1xi1>
    %323 = vector.broadcast %322 : vector<16x1xi1> to vector<16x64xi1>
    %324 = vector.broadcast %cst_115 : f32 to vector<16x64xf32>
    %325 = arith.select %323, %312, %324 : vector<16x64xi1>, vector<16x64xf32>
    %326 = arith.addf %305, %325 : vector<16x64xf32>
    %c7 = arith.constant 7 : index
    %c0_116 = arith.constant 0 : index
    %c0_117 = arith.constant 0 : index
    %327 = vector.load %arg10[%c7, %c0_116, %c0_117] : memref<9x32x64xf32, #tpu.memory_space<vmem>>, vector<1x32x64xf32>
    %328 = vector.shape_cast %327 : vector<1x32x64xf32> to vector<32x64xf32>
    %329 = arith.truncf %328 : vector<32x64xf32> to vector<32x64xbf16>
    %cst_118 = arith.constant dense<0.000000e+00> : vector<16x64xf32>
    %330 = tpu.matmul %179, %329, %cst_118 {dimension_numbers = #tpu.dot_dimension_numbers<[1], [0], [0], [1], [0, 0, 1, 1], [], []>} : vector<16x32xbf16>, vector<32x64xbf16>, vector<16x64xf32> -> vector<16x64xf32>
    %331 = vector.extract_strided_slice %330 {offsets = [3, 0], sizes = [13, 64], strides = [1, 1]} : vector<16x64xf32> to vector<13x64xf32>
    %cst_119 = arith.constant 0.000000e+00 : f32
    %332 = vector.broadcast %cst_119 : f32 to vector<3x64xf32>
    %333 = tpu.concatenate %331, %332 in 0 : vector<13x64xf32>, vector<3x64xf32> -> vector<16x64xf32>
    %c3_i32 = arith.constant 3 : i32
    %334 = vector.broadcast %c3_i32 : i32 to vector<16x1xi32>
    %335 = arith.addi %181, %334 : vector<16x1xi32>
    %c0_i32_120 = arith.constant 0 : i32
    %336 = vector.broadcast %c0_i32_120 : i32 to vector<16x1xi32>
    %337 = arith.cmpi sge, %335, %336 : vector<16x1xi32>
    %c3_i32_121 = arith.constant 3 : i32
    %338 = vector.broadcast %c3_i32_121 : i32 to vector<16x1xi32>
    %339 = arith.addi %181, %338 : vector<16x1xi32>
    %c8_i32_122 = arith.constant 8 : i32
    %340 = vector.broadcast %c8_i32_122 : i32 to vector<16x1xi32>
    %341 = arith.cmpi slt, %339, %340 : vector<16x1xi32>
    %342 = arith.andi %337, %341 : vector<16x1xi1>
    %cst_123 = arith.constant 0.000000e+00 : f32
    %343 = vector.shape_cast %342 : vector<16x1xi1> to vector<16x1xi1>
    %344 = vector.broadcast %343 : vector<16x1xi1> to vector<16x64xi1>
    %345 = vector.broadcast %cst_123 : f32 to vector<16x64xf32>
    %346 = arith.select %344, %333, %345 : vector<16x64xi1>, vector<16x64xf32>
    %347 = arith.addf %326, %346 : vector<16x64xf32>
    %c8 = arith.constant 8 : index
    %c0_124 = arith.constant 0 : index
    %c0_125 = arith.constant 0 : index
    %348 = vector.load %arg10[%c8, %c0_124, %c0_125] : memref<9x32x64xf32, #tpu.memory_space<vmem>>, vector<1x32x64xf32>
    %349 = vector.shape_cast %348 : vector<1x32x64xf32> to vector<32x64xf32>
    %350 = arith.truncf %349 : vector<32x64xf32> to vector<32x64xbf16>
    %cst_126 = arith.constant dense<0.000000e+00> : vector<16x64xf32>
    %351 = tpu.matmul %179, %350, %cst_126 {dimension_numbers = #tpu.dot_dimension_numbers<[1], [0], [0], [1], [0, 0, 1, 1], [], []>} : vector<16x32xbf16>, vector<32x64xbf16>, vector<16x64xf32> -> vector<16x64xf32>
    %352 = vector.extract_strided_slice %351 {offsets = [4, 0], sizes = [12, 64], strides = [1, 1]} : vector<16x64xf32> to vector<12x64xf32>
    %cst_127 = arith.constant 0.000000e+00 : f32
    %353 = vector.broadcast %cst_127 : f32 to vector<4x64xf32>
    %354 = tpu.concatenate %352, %353 in 0 : vector<12x64xf32>, vector<4x64xf32> -> vector<16x64xf32>
    %c4_i32 = arith.constant 4 : i32
    %355 = vector.broadcast %c4_i32 : i32 to vector<16x1xi32>
    %356 = arith.addi %181, %355 : vector<16x1xi32>
    %c0_i32_128 = arith.constant 0 : i32
    %357 = vector.broadcast %c0_i32_128 : i32 to vector<16x1xi32>
    %358 = arith.cmpi sge, %356, %357 : vector<16x1xi32>
    %c4_i32_129 = arith.constant 4 : i32
    %359 = vector.broadcast %c4_i32_129 : i32 to vector<16x1xi32>
    %360 = arith.addi %181, %359 : vector<16x1xi32>
    %c8_i32_130 = arith.constant 8 : i32
    %361 = vector.broadcast %c8_i32_130 : i32 to vector<16x1xi32>
    %362 = arith.cmpi slt, %360, %361 : vector<16x1xi32>
    %363 = arith.andi %358, %362 : vector<16x1xi1>
    %cst_131 = arith.constant 0.000000e+00 : f32
    %364 = vector.shape_cast %363 : vector<16x1xi1> to vector<16x1xi1>
    %365 = vector.broadcast %364 : vector<16x1xi1> to vector<16x64xi1>
    %366 = vector.broadcast %cst_131 : f32 to vector<16x64xf32>
    %367 = arith.select %365, %354, %366 : vector<16x64xi1>, vector<16x64xf32>
    %368 = arith.addf %347, %367 : vector<16x64xf32>
    %c0_132 = arith.constant 0 : index
    %c0_133 = arith.constant 0 : index
    %369 = vector.load %arg11[%c0_132, %c0_133] : memref<1x64xf32, #tpu.memory_space<vmem>>, vector<1x64xf32>
    %370 = vector.broadcast %369 : vector<1x64xf32> to vector<16x64xf32>
    %371 = arith.addf %368, %370 : vector<16x64xf32>
    %cst_134 = arith.constant 0.000000e+00 : f32
    %372 = vector.broadcast %cst_134 : f32 to vector<16x64xf32>
    %373 = arith.maximumf %371, %372 : vector<16x64xf32>
    %374 = arith.truncf %373 : vector<16x64xf32> to vector<16x64xbf16>
    %c0_135 = arith.constant 0 : index
    %c0_136 = arith.constant 0 : index
    %375 = vector.load %arg12[%c0_135, %c0_136] : memref<64x32xf32, #tpu.memory_space<vmem>>, vector<64x32xf32>
    %376 = arith.truncf %375 : vector<64x32xf32> to vector<64x32xbf16>
    %cst_137 = arith.constant dense<0.000000e+00> : vector<16x32xf32>
    %377 = tpu.matmul %374, %376, %cst_137 {dimension_numbers = #tpu.dot_dimension_numbers<[1], [0], [0], [1], [0, 0, 1, 1], [], []>} : vector<16x64xbf16>, vector<64x32xbf16>, vector<16x32xf32> -> vector<16x32xf32>
    %c0_138 = arith.constant 0 : index
    %c0_139 = arith.constant 0 : index
    %378 = vector.load %arg13[%c0_138, %c0_139] : memref<1x32xf32, #tpu.memory_space<vmem>>, vector<1x32xf32>
    %379 = vector.broadcast %378 : vector<1x32xf32> to vector<16x32xf32>
    %380 = arith.addf %377, %379 : vector<16x32xf32>
    %381 = arith.addf %380, %178 : vector<16x32xf32>
    %c0_140 = arith.constant 0 : index
    %c0_141 = arith.constant 0 : index
    %382 = vector.load %arg14[%c0_140, %c0_141] : memref<1x32xf32, #tpu.memory_space<vmem>>, vector<1x32xf32>
    %c0_142 = arith.constant 0 : index
    %c0_143 = arith.constant 0 : index
    %383 = vector.load %arg15[%c0_142, %c0_143] : memref<1x32xf32, #tpu.memory_space<vmem>>, vector<1x32xf32>
    %cst_144 = arith.constant dense<0.000000e+00> : vector<16xf32>
    %384 = vector.multi_reduction <add>, %381, %cst_144 [1] : vector<16x32xf32> to vector<16xf32>
    %385 = vector.shape_cast %384 : vector<16xf32> to vector<16x1xf32>
    %cst_145 = arith.constant 3.200000e+01 : f32
    %386 = vector.broadcast %cst_145 : f32 to vector<16x1xf32>
    %387 = arith.divf %385, %386 : vector<16x1xf32>
    %388 = vector.broadcast %387 : vector<16x1xf32> to vector<16x32xf32>
    %389 = arith.subf %381, %388 : vector<16x32xf32>
    %390 = arith.mulf %389, %389 : vector<16x32xf32>
    %cst_146 = arith.constant dense<0.000000e+00> : vector<16xf32>
    %391 = vector.multi_reduction <add>, %390, %cst_146 [1] : vector<16x32xf32> to vector<16xf32>
    %392 = vector.shape_cast %391 : vector<16xf32> to vector<16x1xf32>
    %cst_147 = arith.constant 3.200000e+01 : f32
    %393 = vector.broadcast %cst_147 : f32 to vector<16x1xf32>
    %394 = arith.divf %392, %393 : vector<16x1xf32>
    %395 = vector.broadcast %387 : vector<16x1xf32> to vector<16x32xf32>
    %396 = arith.subf %381, %395 : vector<16x32xf32>
    %cst_148 = arith.constant 9.99999974E-6 : f32
    %397 = vector.broadcast %cst_148 : f32 to vector<16x1xf32>
    %398 = arith.addf %394, %397 : vector<16x1xf32>
    %399 = math.rsqrt %398 : vector<16x1xf32>
    %400 = vector.broadcast %399 : vector<16x1xf32> to vector<16x32xf32>
    %401 = arith.mulf %396, %400 : vector<16x32xf32>
    %402 = vector.broadcast %382 : vector<1x32xf32> to vector<16x32xf32>
    %403 = arith.mulf %401, %402 : vector<16x32xf32>
    %404 = vector.broadcast %383 : vector<1x32xf32> to vector<16x32xf32>
    %405 = arith.addf %403, %404 : vector<16x32xf32>
    %406 = vector.broadcast %5 : vector<16x1xf32> to vector<16x32xf32>
    %407 = arith.mulf %405, %406 : vector<16x32xf32>
    %408 = vector.shape_cast %407 : vector<16x32xf32> to vector<2x8x32xf32>
    %c0_149 = arith.constant 0 : index
    %c0_150 = arith.constant 0 : index
    %c0_151 = arith.constant 0 : index
    %409 = vector.load %arg16[%c0_149, %c0_150, %c0_151] : memref<2x8x32xf32, #tpu.memory_space<vmem>>, vector<2x8x32xf32>
    tpu.vector_store %arg16[%c0_149, %c0_150, %c0_151], %408 {strides = array<i32>} : memref<2x8x32xf32, #tpu.memory_space<vmem>>, vector<2x8x32xf32>,
    return
  }
  func.func @transform_0(%arg0: i32) -> (i32, i32, i32) {
    %c0_i32 = arith.constant 0 : i32
    %c0_i32_0 = arith.constant 0 : i32
    %c0_i32_1 = arith.constant 0 : i32
    return %arg0, %c0_i32, %c0_i32_0 : i32, i32, i32
  }
  func.func @transform_1(%arg0: i32) -> (i32, i32, i32) {
    %c0_i32 = arith.constant 0 : i32
    %c0_i32_0 = arith.constant 0 : i32
    %c0_i32_1 = arith.constant 0 : i32
    return %arg0, %c0_i32, %c0_i32_0 : i32, i32, i32
  }
  func.func @transform_2(%arg0: i32) -> (i32, i32, i32) {
    %c0_i32 = arith.constant 0 : i32
    %c0_i32_0 = arith.constant 0 : i32
    %c0_i32_1 = arith.constant 0 : i32
    return %arg0, %c0_i32, %c0_i32_0 : i32, i32, i32
  }
  func.func @transform_3(%arg0: i32) -> (i32, i32) {
    %c0_i32 = arith.constant 0 : i32
    %c0_i32_0 = arith.constant 0 : i32
    %c0_i32_1 = arith.constant 0 : i32
    return %c0_i32, %c0_i32_0 : i32, i32
  }
  func.func @transform_4(%arg0: i32) -> (i32, i32) {
    %c0_i32 = arith.constant 0 : i32
    %c0_i32_0 = arith.constant 0 : i32
    %c0_i32_1 = arith.constant 0 : i32
    return %c0_i32, %c0_i32_0 : i32, i32
  }
  func.func @transform_5(%arg0: i32) -> (i32, i32) {
    %c0_i32 = arith.constant 0 : i32
    %c0_i32_0 = arith.constant 0 : i32
    %c0_i32_1 = arith.constant 0 : i32
    return %c0_i32, %c0_i32_0 : i32, i32
  }
  func.func @transform_6(%arg0: i32) -> (i32, i32) {
    %c0_i32 = arith.constant 0 : i32
    %c0_i32_0 = arith.constant 0 : i32
    %c0_i32_1 = arith.constant 0 : i32
    return %c0_i32, %c0_i32_0 : i32, i32
  }
  func.func @transform_7(%arg0: i32) -> (i32, i32) {
    %c0_i32 = arith.constant 0 : i32
    %c0_i32_0 = arith.constant 0 : i32
    %c0_i32_1 = arith.constant 0 : i32
    return %c0_i32, %c0_i32_0 : i32, i32
  }
  func.func @transform_8(%arg0: i32) -> (i32, i32) {
    %c0_i32 = arith.constant 0 : i32
    %c0_i32_0 = arith.constant 0 : i32
    %c0_i32_1 = arith.constant 0 : i32
    return %c0_i32, %c0_i32_0 : i32, i32
  }
  func.func @transform_9(%arg0: i32) -> (i32, i32, i32) {
    %c0_i32 = arith.constant 0 : i32
    %c0_i32_0 = arith.constant 0 : i32
    %c0_i32_1 = arith.constant 0 : i32
    %c0_i32_2 = arith.constant 0 : i32
    return %c0_i32, %c0_i32_0, %c0_i32_1 : i32, i32, i32
  }
  func.func @transform_10(%arg0: i32) -> (i32, i32) {
    %c0_i32 = arith.constant 0 : i32
    %c0_i32_0 = arith.constant 0 : i32
    %c0_i32_1 = arith.constant 0 : i32
    return %c0_i32, %c0_i32_0 : i32, i32
  }
  func.func @transform_11(%arg0: i32) -> (i32, i32) {
    %c0_i32 = arith.constant 0 : i32
    %c0_i32_0 = arith.constant 0 : i32
    %c0_i32_1 = arith.constant 0 : i32
    return %c0_i32, %c0_i32_0 : i32, i32
  }
  func.func @transform_12(%arg0: i32) -> (i32, i32) {
    %c0_i32 = arith.constant 0 : i32
    %c0_i32_0 = arith.constant 0 : i32
    %c0_i32_1 = arith.constant 0 : i32
    return %c0_i32, %c0_i32_0 : i32, i32
  }
  func.func @transform_13(%arg0: i32) -> (i32, i32) {
    %c0_i32 = arith.constant 0 : i32
    %c0_i32_0 = arith.constant 0 : i32
    %c0_i32_1 = arith.constant 0 : i32
    return %c0_i32, %c0_i32_0 : i32, i32
  }
  func.func @transform_14(%arg0: i32) -> (i32, i32) {
    %c0_i32 = arith.constant 0 : i32
    %c0_i32_0 = arith.constant 0 : i32
    %c0_i32_1 = arith.constant 0 : i32
    return %c0_i32, %c0_i32_0 : i32, i32
  }
  func.func @transform_15(%arg0: i32) -> (i32, i32, i32) {
    %c0_i32 = arith.constant 0 : i32
    %c0_i32_0 = arith.constant 0 : i32
    %c0_i32_1 = arith.constant 0 : i32
    return %arg0, %c0_i32, %c0_i32_0 : i32, i32, i32
  }
}

</mosaic_0001>

<llo_original>
// kernel: tpu_custom_call.1
$region0: #{tpu_custom_call.1}
  #allocation0 [shape = 'u32[]', space=smem, size = 0x4, offset = 0x4, fixed_abs, tag = 'smem constant byte address 0x4 - core index']
  #allocation1 [shape = 'u32[144,128]{1,0:T(1,128)}', space=vmem, size = 0x12000, scoped, tag = 'internal scratch']
  %s0 = inlined_call_operand.vmem [shape: f32[2,8,32], index: 0, kind: input, shape index: {}]
  %s1 = inlined_call_operand.vmem [shape: f32[2,1,8], index: 1, kind: input, shape index: {}]
  %s2 = inlined_call_operand.vmem [shape: f32[2,8,1], index: 2, kind: input, shape index: {}]
  %s3 = inlined_call_operand.vmem [shape: f32[32,96], index: 3, kind: input, shape index: {}]
  %s4 = inlined_call_operand.vmem [shape: f32[1,96], index: 4, kind: input, shape index: {}]
  %s5 = inlined_call_operand.vmem [shape: f32[32,32], index: 5, kind: input, shape index: {}]
  %s6 = inlined_call_operand.vmem [shape: f32[1,32], index: 6, kind: input, shape index: {}]
  %s7 = inlined_call_operand.vmem [shape: f32[1,32], index: 7, kind: input, shape index: {}]
  %s8 = inlined_call_operand.vmem [shape: f32[1,32], index: 8, kind: input, shape index: {}]
  %s9 = inlined_call_operand.hbm [shape: f32[9,32,64], index: 9, kind: input, shape index: {}]
  %s10 = inlined_call_operand.vmem [shape: f32[1,64], index: 10, kind: input, shape index: {}]
  %s11 = inlined_call_operand.vmem [shape: f32[64,32], index: 11, kind: input, shape index: {}]
  %s12 = inlined_call_operand.vmem [shape: f32[1,32], index: 12, kind: input, shape index: {}]
  %s13 = inlined_call_operand.vmem [shape: f32[1,32], index: 13, kind: input, shape index: {}]
  %s14 = inlined_call_operand.vmem [shape: f32[1,32], index: 14, kind: input, shape index: {}]
  %s15 = inlined_call_operand.hbm [shape: f32[2,8,32], index: 15, kind: output, shape index: {}]
  %s16 = sld [smem:[#allocation0]]
  $region74: #{tpu_custom_call.1} parent=0
    _
  %s18 = ssub.s32 1, %s16
  %s19 = scalar_select 0, %s18, %s16
  $region1: #{tpu_custom_call.1} parent=0
    #allocation2 [shape = 'u8[147456]{0}', space=vmem, size = 0x24000, scoped, tag = 'input window, operand 9, single buffered']
    #allocation3 [shape = 's32[1]{0}', space=sflag, size = 0x4, scoped, tag = 'scoped memory for tpu_custom_call.1']
    #allocation4 [shape = 's32[1]{0}', space=sflag, size = 0x4, scoped, tag = 'scoped memory for tpu_custom_call.1']
    #allocation5 [shape = 'u8[8192]{0}', space=vmem, size = 0x2000, scoped, tag = 'output window, operand 0, single buffered']
    %20 = vsyncpa [#allocation3], 0
    %21 = vsyncpa [#allocation4], 0
    // Predicated region
    $region2: #{tpu_custom_call.1} parent=1 // pred_check
      _
    $region3: #{tpu_custom_call.1} parent=1 // pred_check_branch
      %23 = sbr.rel (0) target = $region5
    $region4: #{tpu_custom_call.1} parent=1 // pred_region
      _
    $region5: #{tpu_custom_call.1} parent=1 // pred_fallthru
      _
    // Predicated region
    $region6: #{tpu_custom_call.1} parent=1 // pred_check
      _
    $region7: #{tpu_custom_call.1} parent=1 // pred_check_branch
      %25 = sbr.rel (0) target = $region9
    $region8: #{tpu_custom_call.1} parent=1 // pred_region
      _
    $region9: #{tpu_custom_call.1} parent=1 // pred_fallthru
      _
    // Predicated region
    $region10: #{tpu_custom_call.1} parent=1 // pred_check
      _
    $region11: #{tpu_custom_call.1} parent=1 // pred_check_branch
      %27 = sbr.rel (0) target = $region13
    $region12: #{tpu_custom_call.1} parent=1 // pred_region
      _
    $region13: #{tpu_custom_call.1} parent=1 // pred_fallthru
      _
    // Predicated region
    $region14: #{tpu_custom_call.1} parent=1 // pred_check
      _
    $region15: #{tpu_custom_call.1} parent=1 // pred_check_branch
      %29 = sbr.rel (0) target = $region17
    $region16: #{tpu_custom_call.1} parent=1 // pred_region
      _
    $region17: #{tpu_custom_call.1} parent=1 // pred_fallthru
      _
    // Predicated region
    $region18: #{tpu_custom_call.1} parent=1 // pred_check
      _
    $region19: #{tpu_custom_call.1} parent=1 // pred_check_branch
      %31 = sbr.rel (0) target = $region21
    $region20: #{tpu_custom_call.1} parent=1 // pred_region
      _
    $region21: #{tpu_custom_call.1} parent=1 // pred_fallthru
      _
    // Predicated region
    $region22: #{tpu_custom_call.1} parent=1 // pred_check
      _
    $region23: #{tpu_custom_call.1} parent=1 // pred_check_branch
      %33 = sbr.rel (0) target = $region25
    $region24: #{tpu_custom_call.1} parent=1 // pred_region
      _
    $region25: #{tpu_custom_call.1} parent=1 // pred_fallthru
      _
    // Predicated region
    $region26: #{tpu_custom_call.1} parent=1 // pred_check
      _
    $region27: #{tpu_custom_call.1} parent=1 // pred_check_branch
      %35 = sbr.rel (0) target = $region29
    $region28: #{tpu_custom_call.1} parent=1 // pred_region
      _
    $region29: #{tpu_custom_call.1} parent=1 // pred_fallthru
      _
    // Predicated region
    $region30: #{tpu_custom_call.1} parent=1 // pred_check
      _
    $region31: #{tpu_custom_call.1} parent=1 // pred_check_branch
      %37 = sbr.rel (0) target = $region33
    $region32: #{tpu_custom_call.1} parent=1 // pred_region
      _
    $region33: #{tpu_custom_call.1} parent=1 // pred_fallthru
      _
    // Predicated region
    $region34: #{tpu_custom_call.1} parent=1 // pred_check
      _
    $region35: #{tpu_custom_call.1} parent=1 // pred_check_branch
      %39 = sbr.rel (0) target = $region37
    $region36: #{tpu_custom_call.1} parent=1 // pred_region
      _
    $region37: #{tpu_custom_call.1} parent=1 // pred_fallthru
      _
    // Predicated region
    $region38: #{tpu_custom_call.1} parent=1 // pred_check
      _
    $region39: #{tpu_custom_call.1} parent=1 // pred_check_branch
      %41 = sbr.rel (0) target = $region41
    $region40: #{tpu_custom_call.1} parent=1 // pred_region
      %s43 = ssub.s32 4608, 4608
      %44 = vsyncadd [#allocation3], %s43
      %s45 = sshll.u32 [#allocation2], 4
      %s46 = int_to_ptr.vmem [resolvable:$true] %s45
      %51 = dma.hbm_to_vmem [thread:$0]  %s9, 4608, %s46, [#allocation3], 128, 128, 8
    $region41: #{tpu_custom_call.1} parent=1 // pred_fallthru
      _
    // Predicated region
    $region42: #{tpu_custom_call.1} parent=1 // pred_check
      _
    $region43: #{tpu_custom_call.1} parent=1 // pred_check_branch
      %53 = sbr.rel (0) target = $region45
    $region44: #{tpu_custom_call.1} parent=1 // pred_region
      _
    $region45: #{tpu_custom_call.1} parent=1 // pred_fallthru
      _
    // Predicated region
    $region46: #{tpu_custom_call.1} parent=1 // pred_check
      _
    $region47: #{tpu_custom_call.1} parent=1 // pred_check_branch
      %55 = sbr.rel (0) target = $region49
    $region48: #{tpu_custom_call.1} parent=1 // pred_region
      _
    $region49: #{tpu_custom_call.1} parent=1 // pred_fallthru
      _
    // Predicated region
    $region50: #{tpu_custom_call.1} parent=1 // pred_check
      _
    $region51: #{tpu_custom_call.1} parent=1 // pred_check_branch
      %57 = sbr.rel (0) target = $region53
    $region52: #{tpu_custom_call.1} parent=1 // pred_region
      _
    $region53: #{tpu_custom_call.1} parent=1 // pred_fallthru
      _
    // Predicated region
    $region54: #{tpu_custom_call.1} parent=1 // pred_check
      _
    $region55: #{tpu_custom_call.1} parent=1 // pred_check_branch
      %59 = sbr.rel (0) target = $region57
    $region56: #{tpu_custom_call.1} parent=1 // pred_region
      _
    $region57: #{tpu_custom_call.1} parent=1 // pred_fallthru
      _
    // Predicated region
    $region58: #{tpu_custom_call.1} parent=1 // pred_check
      _
    $region59: #{tpu_custom_call.1} parent=1 // pred_check_branch
      %61 = sbr.rel (0) target = $region61
    $region60: #{tpu_custom_call.1} parent=1 // pred_region
      _
    $region61: #{tpu_custom_call.1} parent=1 // pred_fallthru
      _
    // Predicated region
    $region62: #{tpu_custom_call.1} parent=1 // pred_check
      _
    $region63: #{tpu_custom_call.1} parent=1 // pred_check_branch
      %63 = sbr.rel (0) target = $region65
    $region64: #{tpu_custom_call.1} parent=1 // pred_region
      %64 = dma.done [#allocation3], 4608
    $region65: #{tpu_custom_call.1} parent=1 // pred_fallthru
      _
    %v66 = vld [vmem:[%s0] sm:$0xff]
    %v67 = vld [vmem:[%s0 + $0x8] sm:$0xff]
    %v68 = vld [vmem:[%s2] sm:$0xff]
    %v69 = vld [vmem:[%s2 + $0x8] sm:$0xff]
    %v70 = vsub.f32 1.0, %v68
    %v71 = vsub.f32 1.0, %v69
    %v72 = vld [vmem:[%s1] sm:$0x1]
    %v73 = vld [vmem:[%s1 + $0x1] sm:$0x1]
    %v74 = vpack.c.bf16 %v67, %v66
    %v75 = vld [vmem:[%s3] sm:$0xff]
    %v76 = vld [vmem:[%s3 + $0x8] sm:$0xff]
    %v77 = vld [vmem:[%s3 + $0x10] sm:$0xff]
    %v78 = vld [vmem:[%s3 + $0x18] sm:$0xff]
    %v79 = vpack.c.bf16 %v76, %v75
    %v80 = vpack.c.bf16 %v78, %v77
    %v81 = vld [vmem:[%s4] sm:$0x1]
    %v83 = vlaneseq
    %v84 = vshrl.u32 %v83, 7
    %v85 = vsub.s32 0, %v84
    %v86 = vrot.slane %v81, %v85
    %vm88 = vcmask 261120
    %v90 = vsel %vm88, %v74, 0
    %92 = vmatprep.subr.bf16.mxu0 0
    %93 = vmatpush1.bf16.msra.mxu0 %v79
    %94 = vmatprep.subr.bf16.mxu0 0
    %95 = vmatpush1.bf16.msra.mxu0 %v80
    %96 = vmatprep.subr.bf16.mxu0 0
    %97 = vmatpush1.bf16.msra.mxu0 0
    %98 = vmatprep.subr.bf16.mxu0 0
    %99 = vmatpush1.bf16.msra.mxu0 0
    %100 = vmatprep.subr.bf16.mxu0 0
    %101 = vmatpush1.bf16.msra.mxu0 0
    %102 = vmatprep.subr.bf16.mxu0 0
    %103 = vmatpush1.bf16.msra.mxu0 0
    %104 = vmatprep.subr.bf16.mxu0 0
    %105 = vmatpush1.bf16.msra.mxu0 0
    %106 = vmatprep.subr.bf16.mxu0 0
    %107 = vmatpush1.bf16.msra.mxu0 0
    %108 = vmatprep.subr.bf16.mxu0 0
    %109 = vmatpush1.bf16.msra.mxu0 0
    %110 = vmatprep.subr.bf16.mxu0 0
    %111 = vmatpush1.bf16.msra.mxu0 0
    %112 = vmatprep.subr.bf16.mxu0 0
    %113 = vmatpush1.bf16.msra.mxu0 0
    %114 = vmatprep.subr.bf16.mxu0 0
    %115 = vmatpush1.bf16.msra.mxu0 0
    %116 = vmatprep.subr.bf16.mxu0 0
    %117 = vmatpush1.bf16.msra.mxu0 0
    %118 = vmatprep.subr.bf16.mxu0 0
    %119 = vmatpush1.bf16.msra.mxu0 0
    %120 = vmatprep.subr.bf16.mxu0 0
    %121 = vmatpush1.bf16.msra.mxu0 0
    %122 = vmatprep.subr.bf16.mxu0 0
    %123 = vmatpush1.bf16.msra.mxu0 0
    %124 = vmatprep.mubr.bf16.mxu0 0
    %125 = vmatmul.mubr.bf16.gmra.mrb[0].mxu0 %v90
    %v126 = vpop.f32.mrb[0].mxu0
    %v127 = vadd.f32 %v86, %v126
    %v128 = vpop.f32.mrb[0].mxu0
    %v129 = vpop.f32.mrb[0].mxu0
    %v130 = vadd.f32 %v86, %v129
    %v131 = vpop.f32.mrb[0].mxu0
    %132 = vdwg.mxu0
    %v133 = vld [vmem:[%s5] sm:$0xff]
    %v134 = vld [vmem:[%s5 + $0x8] sm:$0xff]
    %v135 = vld [vmem:[%s5 + $0x10] sm:$0xff]
    %v136 = vld [vmem:[%s5 + $0x18] sm:$0xff]
    %v137 = vpack.c.bf16 %v134, %v133
    %v138 = vpack.c.bf16 %v136, %v135
    %v139 = vpack.c.bf16 %v127, %v127
    %141 = vrot.lane.b32.xlu0 %v139, 96
    %v142 = vpop.permute.xlu0 %141
    %vm143 = vcmask 130048
    %v145 = vsel %vm143, %v139, 0
    %v148 = vsel %vm143, %v142, 0
    %150 = vmatprep.subr.bf16.mxu0 0
    %151 = vmatpush1.bf16.xpose.msra.mxu0 %v148
    %152 = vmatprep.subr.bf16.mxu0 0
    %153 = vmatpush1.bf16.xpose.msra.mxu0 0
    %154 = vmatprep.subr.bf16.mxu0 0
    %155 = vmatpush1.bf16.xpose.msra.mxu0 0
    %156 = vmatprep.subr.bf16.mxu0 0
    %157 = vmatpush1.bf16.xpose.msra.mxu0 0
    %158 = vmatprep.subr.bf16.mxu0 0
    %159 = vmatpush1.bf16.xpose.msra.mxu0 0
    %160 = vmatprep.subr.bf16.mxu0 0
    %161 = vmatpush1.bf16.xpose.msra.mxu0 0
    %162 = vmatprep.subr.bf16.mxu0 0
    %163 = vmatpush1.bf16.xpose.msra.mxu0 0
    %164 = vmatprep.subr.bf16.mxu0 0
    %165 = vmatpush1.bf16.xpose.msra.mxu0 0
    %166 = vmatprep.subr.bf16.mxu0 0
    %167 = vmatpush1.bf16.xpose.msra.mxu0 0
    %168 = vmatprep.subr.bf16.mxu0 0
    %169 = vmatpush1.bf16.xpose.msra.mxu0 0
    %170 = vmatprep.subr.bf16.mxu0 0
    %171 = vmatpush1.bf16.xpose.msra.mxu0 0
    %172 = vmatprep.subr.bf16.mxu0 0
    %173 = vmatpush1.bf16.xpose.msra.mxu0 0
    %174 = vmatprep.subr.bf16.mxu0 0
    %175 = vmatpush1.bf16.xpose.msra.mxu0 0
    %176 = vmatprep.subr.bf16.mxu0 0
    %177 = vmatpush1.bf16.xpose.msra.mxu0 0
    %178 = vmatprep.subr.bf16.mxu0 0
    %179 = vmatpush1.bf16.xpose.msra.mxu0 0
    %180 = vmatprep.subr.bf16.mxu0 0
    %181 = vmatpush1.bf16.xpose.msra.mxu0 0
    %182 = vmatprep.mubr.bf16.mxu0 0
    %183 = vmatmul.mubr.bf16.gmra.mrb[0].mxu0 %v145
    %v184 = vpop.f32.mrb[0].mxu0
    %v185 = vadd.f32 0.0, %v184
    %v186 = vpop.f32.mrb[0].mxu0
    %v187 = vpop.f32.mrb[0].mxu0
    %v188 = vpop.f32.mrb[0].mxu0
    %189 = vdwg.mxu0
    %v190 = vmul.f32 %v185, 0.25
    %vm191 = vcmp.gt.f32.partialorder %v72, 0.5
    %v192 = vsel %vm191, 1, 0
    %v193 = vlaneseq
    %v194 = vshrl.u32 %v193, 7
    %v195 = vsub.s32 0, %v194
    %v196 = vrot.slane %v192, %v195
    %vm197 = vcmp.eq.s32.totalorder %v196, 1
    %v198 = vsel %vm197, -1e+09, %v190
    %vm199 = vcmask 64512
    %v200 = vsel %vm199, %v198, -inf
    %201 = vmax.xlane.f32.xlu0 %v200
    %v202 = vpop.xlane.xlu0 %201
    %v203 = vsub.f32 %v198, %v202
    %v204 = vmul.f32 %v203, 1.442695
    %v205 = vpow.pop %v204
    %v206 = vsel %vm199, %v205, 0.0
    %207 = vadd.xlane.f32.xlu0 %v206
    %v208 = vpop.xlane.xlu0 %207
    %v209 = vrcp.pop %v208
    %v210 = vmul.f32 %v205, %v209
    %v211 = vpack.c.bf16 %v210, %v210
    %212 = vrot.lane.b32.xlu0 %v139, 64
    %v213 = vpop.permute.xlu0 %212
    %v215 = vsel %vm199, %v211, 0
    %vm217 = vcmask 1043456
    %v219 = vsel %vm217, %v213, 0
    %221 = vmatprep.subr.bf16.mxu0 0
    %222 = vmatpush1.bf16.msra.mxu0 %v219
    %223 = vmatprep.subr.bf16.mxu0 0
    %224 = vmatpush1.bf16.msra.mxu0 0
    %225 = vmatprep.subr.bf16.mxu0 0
    %226 = vmatpush1.bf16.msra.mxu0 0
    %227 = vmatprep.subr.bf16.mxu0 0
    %228 = vmatpush1.bf16.msra.mxu0 0
    %229 = vmatprep.subr.bf16.mxu0 0
    %230 = vmatpush1.bf16.msra.mxu0 0
    %231 = vmatprep.subr.bf16.mxu0 0
    %232 = vmatpush1.bf16.msra.mxu0 0
    %233 = vmatprep.subr.bf16.mxu0 0
    %234 = vmatpush1.bf16.msra.mxu0 0
    %235 = vmatprep.subr.bf16.mxu0 0
    %236 = vmatpush1.bf16.msra.mxu0 0
    %237 = vmatprep.subr.bf16.mxu0 0
    %238 = vmatpush1.bf16.msra.mxu0 0
    %239 = vmatprep.subr.bf16.mxu0 0
    %240 = vmatpush1.bf16.msra.mxu0 0
    %241 = vmatprep.subr.bf16.mxu0 0
    %242 = vmatpush1.bf16.msra.mxu0 0
    %243 = vmatprep.subr.bf16.mxu0 0
    %244 = vmatpush1.bf16.msra.mxu0 0
    %245 = vmatprep.subr.bf16.mxu0 0
    %246 = vmatpush1.bf16.msra.mxu0 0
    %247 = vmatprep.subr.bf16.mxu0 0
    %248 = vmatpush1.bf16.msra.mxu0 0
    %249 = vmatprep.subr.bf16.mxu0 0
    %250 = vmatpush1.bf16.msra.mxu0 0
    %251 = vmatprep.subr.bf16.mxu0 0
    %252 = vmatpush1.bf16.msra.mxu0 0
    %253 = vmatprep.mubr.bf16.mxu0 0
    %254 = vmatmul.mubr.bf16.gmra.mrb[0].mxu0 %v215
    %v255 = vpop.f32.mrb[0].mxu0
    %v256 = vadd.f32 0.0, %v255
    %v257 = vpop.f32.mrb[0].mxu0
    %v258 = vpop.f32.mrb[0].mxu0
    %v259 = vpop.f32.mrb[0].mxu0
    %260 = vdwg.mxu0
    %v261 = vpack.c.bf16 %v256, %v256
    %262 = vrot.lane.b32.xlu0 %v139, 112
    %v263 = vpop.permute.xlu0 %262
    %264 = vrot.lane.b32.xlu0 %v139, 80
    %v265 = vpop.permute.xlu0 %264
    %v267 = vsel %vm143, %v263, 0
    %v270 = vsel %vm143, %v265, 0
    %272 = vmatprep.subr.bf16.mxu0 0
    %273 = vmatpush1.bf16.xpose.msra.mxu0 %v270
    %274 = vmatprep.subr.bf16.mxu0 0
    %275 = vmatpush1.bf16.xpose.msra.mxu0 0
    %276 = vmatprep.subr.bf16.mxu0 0
    %277 = vmatpush1.bf16.xpose.msra.mxu0 0
    %278 = vmatprep.subr.bf16.mxu0 0
    %279 = vmatpush1.bf16.xpose.msra.mxu0 0
    %280 = vmatprep.subr.bf16.mxu0 0
    %281 = vmatpush1.bf16.xpose.msra.mxu0 0
    %282 = vmatprep.subr.bf16.mxu0 0
    %283 = vmatpush1.bf16.xpose.msra.mxu0 0
    %284 = vmatprep.subr.bf16.mxu0 0
    %285 = vmatpush1.bf16.xpose.msra.mxu0 0
    %286 = vmatprep.subr.bf16.mxu0 0
    %287 = vmatpush1.bf16.xpose.msra.mxu0 0
    %288 = vmatprep.subr.bf16.mxu0 0
    %289 = vmatpush1.bf16.xpose.msra.mxu0 0
    %290 = vmatprep.subr.bf16.mxu0 0
    %291 = vmatpush1.bf16.xpose.msra.mxu0 0
    %292 = vmatprep.subr.bf16.mxu0 0
    %293 = vmatpush1.bf16.xpose.msra.mxu0 0
    %294 = vmatprep.subr.bf16.mxu0 0
    %295 = vmatpush1.bf16.xpose.msra.mxu0 0
    %296 = vmatprep.subr.bf16.mxu0 0
    %297 = vmatpush1.bf16.xpose.msra.mxu0 0
    %298 = vmatprep.subr.bf16.mxu0 0
    %299 = vmatpush1.bf16.xpose.msra.mxu0 0
    %300 = vmatprep.subr.bf16.mxu0 0
    %301 = vmatpush1.bf16.xpose.msra.mxu0 0
    %302 = vmatprep.subr.bf16.mxu0 0
    %303 = vmatpush1.bf16.xpose.msra.mxu0 0
    %304 = vmatprep.mubr.bf16.mxu0 0
    %305 = vmatmul.mubr.bf16.gmra.mrb[0].mxu0 %v267
    %v306 = vpop.f32.mrb[0].mxu0
    %v307 = vadd.f32 0.0, %v306
    %v308 = vpop.f32.mrb[0].mxu0
    %v309 = vpop.f32.mrb[0].mxu0
    %v310 = vpop.f32.mrb[0].mxu0
    %311 = vdwg.mxu0
    %v312 = vmul.f32 %v307, 0.25
    %v313 = vsel %vm197, -1e+09, %v312
    %v314 = vsel %vm199, %v313, -inf
    %315 = vmax.xlane.f32.xlu0 %v314
    %v316 = vpop.xlane.xlu0 %315
    %v317 = vsub.f32 %v313, %v316
    %v318 = vmul.f32 %v317, 1.442695
    %v319 = vpow.pop %v318
    %v320 = vsel %vm199, %v319, 0.0
    %321 = vadd.xlane.f32.xlu0 %v320
    %v322 = vpop.xlane.xlu0 %321
    %v323 = vrcp.pop %v322
    %v324 = vmul.f32 %v319, %v323
    %v325 = vpack.c.bf16 %v324, %v324
    %326 = vrot.lane.b32.xlu0 %v139, 48
    %v327 = vpop.permute.xlu0 %326
    %v329 = vsel %vm199, %v325, 0
    %v332 = vsel %vm217, %v327, 0
    %334 = vmatprep.subr.bf16.mxu0 0
    %335 = vmatpush1.bf16.msra.mxu0 %v332
    %336 = vmatprep.subr.bf16.mxu0 0
    %337 = vmatpush1.bf16.msra.mxu0 0
    %338 = vmatprep.subr.bf16.mxu0 0
    %339 = vmatpush1.bf16.msra.mxu0 0
    %340 = vmatprep.subr.bf16.mxu0 0
    %341 = vmatpush1.bf16.msra.mxu0 0
    %342 = vmatprep.subr.bf16.mxu0 0
    %343 = vmatpush1.bf16.msra.mxu0 0
    %344 = vmatprep.subr.bf16.mxu0 0
    %345 = vmatpush1.bf16.msra.mxu0 0
    %346 = vmatprep.subr.bf16.mxu0 0
    %347 = vmatpush1.bf16.msra.mxu0 0
    %348 = vmatprep.subr.bf16.mxu0 0
    %349 = vmatpush1.bf16.msra.mxu0 0
    %350 = vmatprep.subr.bf16.mxu0 0
    %351 = vmatpush1.bf16.msra.mxu0 0
    %352 = vmatprep.subr.bf16.mxu0 0
    %353 = vmatpush1.bf16.msra.mxu0 0
    %354 = vmatprep.subr.bf16.mxu0 0
    %355 = vmatpush1.bf16.msra.mxu0 0
    %356 = vmatprep.subr.bf16.mxu0 0
    %357 = vmatpush1.bf16.msra.mxu0 0
    %358 = vmatprep.subr.bf16.mxu0 0
    %359 = vmatpush1.bf16.msra.mxu0 0
    %360 = vmatprep.subr.bf16.mxu0 0
    %361 = vmatpush1.bf16.msra.mxu0 0
    %362 = vmatprep.subr.bf16.mxu0 0
    %363 = vmatpush1.bf16.msra.mxu0 0
    %364 = vmatprep.subr.bf16.mxu0 0
    %365 = vmatpush1.bf16.msra.mxu0 0
    %366 = vmatprep.mubr.bf16.mxu0 0
    %367 = vmatmul.mubr.bf16.gmra.mrb[0].mxu0 %v329
    %v368 = vpop.f32.mrb[0].mxu0
    %v369 = vadd.f32 0.0, %v368
    %v370 = vpop.f32.mrb[0].mxu0
    %v371 = vpop.f32.mrb[0].mxu0
    %v372 = vpop.f32.mrb[0].mxu0
    %373 = vdwg.mxu0
    %v374 = vpack.c.bf16 %v369, %v369
    %v376 = vsel %vm143, %v374, 0
    %378 = vmatprep.subr.bf16.mxu0 0
    %379 = vmatpush1.bf16.msra.mxu0 %v138
    %380 = vmatprep.subr.bf16.mxu0 0
    %381 = vmatpush1.bf16.msra.mxu0 0
    %382 = vmatprep.subr.bf16.mxu0 0
    %383 = vmatpush1.bf16.msra.mxu0 0
    %384 = vmatprep.subr.bf16.mxu0 0
    %385 = vmatpush1.bf16.msra.mxu0 0
    %386 = vmatprep.subr.bf16.mxu0 0
    %387 = vmatpush1.bf16.msra.mxu0 0
    %388 = vmatprep.subr.bf16.mxu0 0
    %389 = vmatpush1.bf16.msra.mxu0 0
    %390 = vmatprep.subr.bf16.mxu0 0
    %391 = vmatpush1.bf16.msra.mxu0 0
    %392 = vmatprep.subr.bf16.mxu0 0
    %393 = vmatpush1.bf16.msra.mxu0 0
    %394 = vmatprep.subr.bf16.mxu0 0
    %395 = vmatpush1.bf16.msra.mxu0 0
    %396 = vmatprep.subr.bf16.mxu0 0
    %397 = vmatpush1.bf16.msra.mxu0 0
    %398 = vmatprep.subr.bf16.mxu0 0
    %399 = vmatpush1.bf16.msra.mxu0 0
    %400 = vmatprep.subr.bf16.mxu0 0
    %401 = vmatpush1.bf16.msra.mxu0 0
    %402 = vmatprep.subr.bf16.mxu0 0
    %403 = vmatpush1.bf16.msra.mxu0 0
    %404 = vmatprep.subr.bf16.mxu0 0
    %405 = vmatpush1.bf16.msra.mxu0 0
    %406 = vmatprep.subr.bf16.mxu0 0
    %407 = vmatpush1.bf16.msra.mxu0 0
    %408 = vmatprep.subr.bf16.mxu0 0
    %409 = vmatpush1.bf16.msra.mxu0 0
    %410 = vmatprep.mubr.bf16.mxu0 0
    %411 = vmatmul.mubr.bf16.gmra.mrb[0].mxu0 %v376
    %v412 = vpop.f32.mrb[0].mxu0
    %v413 = vadd.f32 0.0, %v412
    %v414 = vpop.f32.mrb[0].mxu0
    %v415 = vpop.f32.mrb[0].mxu0
    %v416 = vpop.f32.mrb[0].mxu0
    %417 = vdwg.mxu0
    %v419 = vsel %vm143, %v261, 0
    %421 = vmatprep.subr.bf16.mxu0 0
    %422 = vmatpush1.bf16.msra.mxu0 %v137
    %423 = vmatprep.subr.bf16.mxu0 0
    %424 = vmatpush1.bf16.msra.mxu0 0
    %425 = vmatprep.subr.bf16.mxu0 0
    %426 = vmatpush1.bf16.msra.mxu0 0
    %427 = vmatprep.subr.bf16.mxu0 0
    %428 = vmatpush1.bf16.msra.mxu0 0
    %429 = vmatprep.subr.bf16.mxu0 0
    %430 = vmatpush1.bf16.msra.mxu0 0
    %431 = vmatprep.subr.bf16.mxu0 0
    %432 = vmatpush1.bf16.msra.mxu0 0
    %433 = vmatprep.subr.bf16.mxu0 0
    %434 = vmatpush1.bf16.msra.mxu0 0
    %435 = vmatprep.subr.bf16.mxu0 0
    %436 = vmatpush1.bf16.msra.mxu0 0
    %437 = vmatprep.subr.bf16.mxu0 0
    %438 = vmatpush1.bf16.msra.mxu0 0
    %439 = vmatprep.subr.bf16.mxu0 0
    %440 = vmatpush1.bf16.msra.mxu0 0
    %441 = vmatprep.subr.bf16.mxu0 0
    %442 = vmatpush1.bf16.msra.mxu0 0
    %443 = vmatprep.subr.bf16.mxu0 0
    %444 = vmatpush1.bf16.msra.mxu0 0
    %445 = vmatprep.subr.bf16.mxu0 0
    %446 = vmatpush1.bf16.msra.mxu0 0
    %447 = vmatprep.subr.bf16.mxu0 0
    %448 = vmatpush1.bf16.msra.mxu0 0
    %449 = vmatprep.subr.bf16.mxu0 0
    %450 = vmatpush1.bf16.msra.mxu0 0
    %451 = vmatprep.subr.bf16.mxu0 0
    %452 = vmatpush1.bf16.msra.mxu0 0
    %453 = vmatprep.mubr.bf16.mxu0 0
    %454 = vmatmul.mubr.bf16.gmra.mrb[0].mxu0 %v419
    %v455 = vpop.f32.mrb[0].mxu0
    %v456 = vadd.f32 %v413, %v455
    %v457 = vpop.f32.mrb[0].mxu0
    %v458 = vpop.f32.mrb[0].mxu0
    %v459 = vpop.f32.mrb[0].mxu0
    %460 = vdwg.mxu0
    %v461 = vpack.c.bf16 %v130, %v130
    %463 = vrot.lane.b32.xlu0 %v461, 96
    %v464 = vpop.permute.xlu0 %463
    %v466 = vsel %vm143, %v461, 0
    %v469 = vsel %vm143, %v464, 0
    %471 = vmatprep.subr.bf16.mxu0 0
    %472 = vmatpush1.bf16.xpose.msra.mxu0 %v469
    %473 = vmatprep.subr.bf16.mxu0 0
    %474 = vmatpush1.bf16.xpose.msra.mxu0 0
    %475 = vmatprep.subr.bf16.mxu0 0
    %476 = vmatpush1.bf16.xpose.msra.mxu0 0
    %477 = vmatprep.subr.bf16.mxu0 0
    %478 = vmatpush1.bf16.xpose.msra.mxu0 0
    %479 = vmatprep.subr.bf16.mxu0 0
    %480 = vmatpush1.bf16.xpose.msra.mxu0 0
    %481 = vmatprep.subr.bf16.mxu0 0
    %482 = vmatpush1.bf16.xpose.msra.mxu0 0
    %483 = vmatprep.subr.bf16.mxu0 0
    %484 = vmatpush1.bf16.xpose.msra.mxu0 0
    %485 = vmatprep.subr.bf16.mxu0 0
    %486 = vmatpush1.bf16.xpose.msra.mxu0 0
    %487 = vmatprep.subr.bf16.mxu0 0
    %488 = vmatpush1.bf16.xpose.msra.mxu0 0
    %489 = vmatprep.subr.bf16.mxu0 0
    %490 = vmatpush1.bf16.xpose.msra.mxu0 0
    %491 = vmatprep.subr.bf16.mxu0 0
    %492 = vmatpush1.bf16.xpose.msra.mxu0 0
    %493 = vmatprep.subr.bf16.mxu0 0
    %494 = vmatpush1.bf16.xpose.msra.mxu0 0
    %495 = vmatprep.subr.bf16.mxu0 0
    %496 = vmatpush1.bf16.xpose.msra.mxu0 0
    %497 = vmatprep.subr.bf16.mxu0 0
    %498 = vmatpush1.bf16.xpose.msra.mxu0 0
    %499 = vmatprep.subr.bf16.mxu0 0
    %500 = vmatpush1.bf16.xpose.msra.mxu0 0
    %501 = vmatprep.subr.bf16.mxu0 0
    %502 = vmatpush1.bf16.xpose.msra.mxu0 0
    %503 = vmatprep.mubr.bf16.mxu0 0
    %504 = vmatmul.mubr.bf16.gmra.mrb[0].mxu0 %v466
    %v505 = vpop.f32.mrb[0].mxu0
    %v506 = vadd.f32 0.0, %v505
    %v507 = vpop.f32.mrb[0].mxu0
    %v508 = vpop.f32.mrb[0].mxu0
    %v509 = vpop.f32.mrb[0].mxu0
    %510 = vdwg.mxu0
    %v511 = vmul.f32 %v506, 0.25
    %vm512 = vcmp.gt.f32.partialorder %v73, 0.5
    %v513 = vsel %vm512, 1, 0
    %v514 = vlaneseq
    %v515 = vshrl.u32 %v514, 7
    %v516 = vsub.s32 0, %v515
    %v517 = vrot.slane %v513, %v516
    %vm518 = vcmp.eq.s32.totalorder %v517, 1
    %v519 = vsel %vm518, -1e+09, %v511
    %v520 = vsel %vm199, %v519, -inf
    %521 = vmax.xlane.f32.xlu0 %v520
    %v522 = vpop.xlane.xlu0 %521
    %v523 = vsub.f32 %v519, %v522
    %v524 = vmul.f32 %v523, 1.442695
    %v525 = vpow.pop %v524
    %v526 = vsel %vm199, %v525, 0.0
    %527 = vadd.xlane.f32.xlu0 %v526
    %v528 = vpop.xlane.xlu0 %527
    %v529 = vrcp.pop %v528
    %v530 = vmul.f32 %v525, %v529
    %v531 = vpack.c.bf16 %v530, %v530
    %532 = vrot.lane.b32.xlu0 %v461, 64
    %v533 = vpop.permute.xlu0 %532
    %v535 = vsel %vm199, %v531, 0
    %v538 = vsel %vm217, %v533, 0
    %540 = vmatprep.subr.bf16.mxu0 0
    %541 = vmatpush1.bf16.msra.mxu0 %v538
    %542 = vmatprep.subr.bf16.mxu0 0
    %543 = vmatpush1.bf16.msra.mxu0 0
    %544 = vmatprep.subr.bf16.mxu0 0
    %545 = vmatpush1.bf16.msra.mxu0 0
    %546 = vmatprep.subr.bf16.mxu0 0
    %547 = vmatpush1.bf16.msra.mxu0 0
    %548 = vmatprep.subr.bf16.mxu0 0
    %549 = vmatpush1.bf16.msra.mxu0 0
    %550 = vmatprep.subr.bf16.mxu0 0
    %551 = vmatpush1.bf16.msra.mxu0 0
    %552 = vmatprep.subr.bf16.mxu0 0
    %553 = vmatpush1.bf16.msra.mxu0 0
    %554 = vmatprep.subr.bf16.mxu0 0
    %555 = vmatpush1.bf16.msra.mxu0 0
    %556 = vmatprep.subr.bf16.mxu0 0
    %557 = vmatpush1.bf16.msra.mxu0 0
    %558 = vmatprep.subr.bf16.mxu0 0
    %559 = vmatpush1.bf16.msra.mxu0 0
    %560 = vmatprep.subr.bf16.mxu0 0
    %561 = vmatpush1.bf16.msra.mxu0 0
    %562 = vmatprep.subr.bf16.mxu0 0
    %563 = vmatpush1.bf16.msra.mxu0 0
    %564 = vmatprep.subr.bf16.mxu0 0
    %565 = vmatpush1.bf16.msra.mxu0 0
    %566 = vmatprep.subr.bf16.mxu0 0
    %567 = vmatpush1.bf16.msra.mxu0 0
    %568 = vmatprep.subr.bf16.mxu0 0
    %569 = vmatpush1.bf16.msra.mxu0 0
    %570 = vmatprep.subr.bf16.mxu0 0
    %571 = vmatpush1.bf16.msra.mxu0 0
    %572 = vmatprep.mubr.bf16.mxu0 0
    %573 = vmatmul.mubr.bf16.gmra.mrb[0].mxu0 %v535
    %v574 = vpop.f32.mrb[0].mxu0
    %v575 = vadd.f32 0.0, %v574
    %v576 = vpop.f32.mrb[0].mxu0
    %v577 = vpop.f32.mrb[0].mxu0
    %v578 = vpop.f32.mrb[0].mxu0
    %579 = vdwg.mxu0
    %v580 = vpack.c.bf16 %v575, %v575
    %581 = vrot.lane.b32.xlu0 %v461, 112
    %v582 = vpop.permute.xlu0 %581
    %583 = vrot.lane.b32.xlu0 %v461, 80
    %v584 = vpop.permute.xlu0 %583
    %v586 = vsel %vm143, %v582, 0
    %v589 = vsel %vm143, %v584, 0
    %591 = vmatprep.subr.bf16.mxu0 0
    %592 = vmatpush1.bf16.xpose.msra.mxu0 %v589
    %593 = vmatprep.subr.bf16.mxu0 0
    %594 = vmatpush1.bf16.xpose.msra.mxu0 0
    %595 = vmatprep.subr.bf16.mxu0 0
    %596 = vmatpush1.bf16.xpose.msra.mxu0 0
    %597 = vmatprep.subr.bf16.mxu0 0
    %598 = vmatpush1.bf16.xpose.msra.mxu0 0
    %599 = vmatprep.subr.bf16.mxu0 0
    %600 = vmatpush1.bf16.xpose.msra.mxu0 0
    %601 = vmatprep.subr.bf16.mxu0 0
    %602 = vmatpush1.bf16.xpose.msra.mxu0 0
    %603 = vmatprep.subr.bf16.mxu0 0
    %604 = vmatpush1.bf16.xpose.msra.mxu0 0
    %605 = vmatprep.subr.bf16.mxu0 0
    %606 = vmatpush1.bf16.xpose.msra.mxu0 0
    %607 = vmatprep.subr.bf16.mxu0 0
    %608 = vmatpush1.bf16.xpose.msra.mxu0 0
    %609 = vmatprep.subr.bf16.mxu0 0
    %610 = vmatpush1.bf16.xpose.msra.mxu0 0
    %611 = vmatprep.subr.bf16.mxu0 0
    %612 = vmatpush1.bf16.xpose.msra.mxu0 0
    %613 = vmatprep.subr.bf16.mxu0 0
    %614 = vmatpush1.bf16.xpose.msra.mxu0 0
    %615 = vmatprep.subr.bf16.mxu0 0
    %616 = vmatpush1.bf16.xpose.msra.mxu0 0
    %617 = vmatprep.subr.bf16.mxu0 0
    %618 = vmatpush1.bf16.xpose.msra.mxu0 0
    %619 = vmatprep.subr.bf16.mxu0 0
    %620 = vmatpush1.bf16.xpose.msra.mxu0 0
    %621 = vmatprep.subr.bf16.mxu0 0
    %622 = vmatpush1.bf16.xpose.msra.mxu0 0
    %623 = vmatprep.mubr.bf16.mxu0 0
    %624 = vmatmul.mubr.bf16.gmra.mrb[0].mxu0 %v586
    %v625 = vpop.f32.mrb[0].mxu0
    %v626 = vadd.f32 0.0, %v625
    %v627 = vpop.f32.mrb[0].mxu0
    %v628 = vpop.f32.mrb[0].mxu0
    %v629 = vpop.f32.mrb[0].mxu0
    %630 = vdwg.mxu0
    %v631 = vmul.f32 %v626, 0.25
    %v632 = vsel %vm518, -1e+09, %v631
    %v633 = vsel %vm199, %v632, -inf
    %634 = vmax.xlane.f32.xlu0 %v633
    %v635 = vpop.xlane.xlu0 %634
    %v636 = vsub.f32 %v632, %v635
    %v637 = vmul.f32 %v636, 1.442695
    %v638 = vpow.pop %v637
    %v639 = vsel %vm199, %v638, 0.0
    %640 = vadd.xlane.f32.xlu0 %v639
    %v641 = vpop.xlane.xlu0 %640
    %v642 = vrcp.pop %v641
    %v643 = vmul.f32 %v638, %v642
    %v644 = vpack.c.bf16 %v643, %v643
    %645 = vrot.lane.b32.xlu0 %v461, 48
    %v646 = vpop.permute.xlu0 %645
    %v648 = vsel %vm199, %v644, 0
    %v651 = vsel %vm217, %v646, 0
    %653 = vmatprep.subr.bf16.mxu0 0
    %654 = vmatpush1.bf16.msra.mxu0 %v651
    %655 = vmatprep.subr.bf16.mxu0 0
    %656 = vmatpush1.bf16.msra.mxu0 0
    %657 = vmatprep.subr.bf16.mxu0 0
    %658 = vmatpush1.bf16.msra.mxu0 0
    %659 = vmatprep.subr.bf16.mxu0 0
    %660 = vmatpush1.bf16.msra.mxu0 0
    %661 = vmatprep.subr.bf16.mxu0 0
    %662 = vmatpush1.bf16.msra.mxu0 0
    %663 = vmatprep.subr.bf16.mxu0 0
    %664 = vmatpush1.bf16.msra.mxu0 0
    %665 = vmatprep.subr.bf16.mxu0 0
    %666 = vmatpush1.bf16.msra.mxu0 0
    %667 = vmatprep.subr.bf16.mxu0 0
    %668 = vmatpush1.bf16.msra.mxu0 0
    %669 = vmatprep.subr.bf16.mxu0 0
    %670 = vmatpush1.bf16.msra.mxu0 0
    %671 = vmatprep.subr.bf16.mxu0 0
    %672 = vmatpush1.bf16.msra.mxu0 0
    %673 = vmatprep.subr.bf16.mxu0 0
    %674 = vmatpush1.bf16.msra.mxu0 0
    %675 = vmatprep.subr.bf16.mxu0 0
    %676 = vmatpush1.bf16.msra.mxu0 0
    %677 = vmatprep.subr.bf16.mxu0 0
    %678 = vmatpush1.bf16.msra.mxu0 0
    %679 = vmatprep.subr.bf16.mxu0 0
    %680 = vmatpush1.bf16.msra.mxu0 0
    %681 = vmatprep.subr.bf16.mxu0 0
    %682 = vmatpush1.bf16.msra.mxu0 0
    %683 = vmatprep.subr.bf16.mxu0 0
    %684 = vmatpush1.bf16.msra.mxu0 0
    %685 = vmatprep.mubr.bf16.mxu0 0
    %686 = vmatmul.mubr.bf16.gmra.mrb[0].mxu0 %v648
    %v687 = vpop.f32.mrb[0].mxu0
    %v688 = vadd.f32 0.0, %v687
    %v689 = vpop.f32.mrb[0].mxu0
    %v690 = vpop.f32.mrb[0].mxu0
    %v691 = vpop.f32.mrb[0].mxu0
    %692 = vdwg.mxu0
    %v693 = vpack.c.bf16 %v688, %v688
    %v695 = vsel %vm143, %v693, 0
    %697 = vmatprep.subr.bf16.mxu0 0
    %698 = vmatpush1.bf16.msra.mxu0 %v138
    %699 = vmatprep.subr.bf16.mxu0 0
    %700 = vmatpush1.bf16.msra.mxu0 0
    %701 = vmatprep.subr.bf16.mxu0 0
    %702 = vmatpush1.bf16.msra.mxu0 0
    %703 = vmatprep.subr.bf16.mxu0 0
    %704 = vmatpush1.bf16.msra.mxu0 0
    %705 = vmatprep.subr.bf16.mxu0 0
    %706 = vmatpush1.bf16.msra.mxu0 0
    %707 = vmatprep.subr.bf16.mxu0 0
    %708 = vmatpush1.bf16.msra.mxu0 0
    %709 = vmatprep.subr.bf16.mxu0 0
    %710 = vmatpush1.bf16.msra.mxu0 0
    %711 = vmatprep.subr.bf16.mxu0 0
    %712 = vmatpush1.bf16.msra.mxu0 0
    %713 = vmatprep.subr.bf16.mxu0 0
    %714 = vmatpush1.bf16.msra.mxu0 0
    %715 = vmatprep.subr.bf16.mxu0 0
    %716 = vmatpush1.bf16.msra.mxu0 0
    %717 = vmatprep.subr.bf16.mxu0 0
    %718 = vmatpush1.bf16.msra.mxu0 0
    %719 = vmatprep.subr.bf16.mxu0 0
    %720 = vmatpush1.bf16.msra.mxu0 0
    %721 = vmatprep.subr.bf16.mxu0 0
    %722 = vmatpush1.bf16.msra.mxu0 0
    %723 = vmatprep.subr.bf16.mxu0 0
    %724 = vmatpush1.bf16.msra.mxu0 0
    %725 = vmatprep.subr.bf16.mxu0 0
    %726 = vmatpush1.bf16.msra.mxu0 0
    %727 = vmatprep.subr.bf16.mxu0 0
    %728 = vmatpush1.bf16.msra.mxu0 0
    %729 = vmatprep.mubr.bf16.mxu0 0
    %730 = vmatmul.mubr.bf16.gmra.mrb[0].mxu0 %v695
    %v731 = vpop.f32.mrb[0].mxu0
    %v732 = vadd.f32 0.0, %v731
    %v733 = vpop.f32.mrb[0].mxu0
    %v734 = vpop.f32.mrb[0].mxu0
    %v735 = vpop.f32.mrb[0].mxu0
    %736 = vdwg.mxu0
    %v738 = vsel %vm143, %v580, 0
    %740 = vmatprep.subr.bf16.mxu0 0
    %741 = vmatpush1.bf16.msra.mxu0 %v137
    %742 = vmatprep.subr.bf16.mxu0 0
    %743 = vmatpush1.bf16.msra.mxu0 0
    %744 = vmatprep.subr.bf16.mxu0 0
    %745 = vmatpush1.bf16.msra.mxu0 0
    %746 = vmatprep.subr.bf16.mxu0 0
    %747 = vmatpush1.bf16.msra.mxu0 0
    %748 = vmatprep.subr.bf16.mxu0 0
    %749 = vmatpush1.bf16.msra.mxu0 0
    %750 = vmatprep.subr.bf16.mxu0 0
    %751 = vmatpush1.bf16.msra.mxu0 0
    %752 = vmatprep.subr.bf16.mxu0 0
    %753 = vmatpush1.bf16.msra.mxu0 0
    %754 = vmatprep.subr.bf16.mxu0 0
    %755 = vmatpush1.bf16.msra.mxu0 0
    %756 = vmatprep.subr.bf16.mxu0 0
    %757 = vmatpush1.bf16.msra.mxu0 0
    %758 = vmatprep.subr.bf16.mxu0 0
    %759 = vmatpush1.bf16.msra.mxu0 0
    %760 = vmatprep.subr.bf16.mxu0 0
    %761 = vmatpush1.bf16.msra.mxu0 0
    %762 = vmatprep.subr.bf16.mxu0 0
    %763 = vmatpush1.bf16.msra.mxu0 0
    %764 = vmatprep.subr.bf16.mxu0 0
    %765 = vmatpush1.bf16.msra.mxu0 0
    %766 = vmatprep.subr.bf16.mxu0 0
    %767 = vmatpush1.bf16.msra.mxu0 0
    %768 = vmatprep.subr.bf16.mxu0 0
    %769 = vmatpush1.bf16.msra.mxu0 0
    %770 = vmatprep.subr.bf16.mxu0 0
    %771 = vmatpush1.bf16.msra.mxu0 0
    %772 = vmatprep.mubr.bf16.mxu0 0
    %773 = vmatmul.mubr.bf16.gmra.mrb[0].mxu0 %v738
    %v774 = vpop.f32.mrb[0].mxu0
    %v775 = vadd.f32 %v732, %v774
    %v776 = vpop.f32.mrb[0].mxu0
    %v777 = vpop.f32.mrb[0].mxu0
    %v778 = vpop.f32.mrb[0].mxu0
    %779 = vdwg.mxu0
    %v780 = vld [vmem:[%s6] sm:$0x1]
    %v782 = vlaneseq
    %v783 = vshrl.u32 %v782, 7
    %v784 = vsub.s32 0, %v783
    %v785 = vrot.slane %v780, %v784
    %v787 = vadd.f32 %v456, %v785
    %v788 = vadd.f32 %v775, %v785
    %v789 = vadd.f32 %v787, %v66
    %v790 = vadd.f32 %v788, %v67
    %v791 = vld [vmem:[%s7] sm:$0x1]
    %v792 = vld [vmem:[%s8] sm:$0x1]
    %v793 = vsel %vm88, %v789, 0.0
    %794 = vadd.xlane.f32.xlu0 %v793
    %v795 = vpop.xlane.xlu0 %794
    %v796 = vsel %vm88, %v790, 0.0
    %797 = vadd.xlane.f32.xlu0 %v796
    %v798 = vpop.xlane.xlu0 %797
    %v799 = vrcp.pop 32.0
    %v800 = vmul.f32 %v795, %v799
    %v801 = vmul.f32 %v798, %v799
    %v802 = vsub.f32 %v789, %v800
    %v803 = vsub.f32 %v790, %v801
    %v804 = vmul.f32 %v802, %v802
    %v805 = vmul.f32 %v803, %v803
    %v806 = vsel %vm88, %v804, 0.0
    %807 = vadd.xlane.f32.xlu0 %v806
    %v808 = vpop.xlane.xlu0 %807
    %v809 = vsel %vm88, %v805, 0.0
    %810 = vadd.xlane.f32.xlu0 %v809
    %v811 = vpop.xlane.xlu0 %810
    %v812 = vmul.f32 %v808, %v799
    %v813 = vmul.f32 %v811, %v799
    %v814 = vadd.f32 %v812, 1e-05
    %v815 = vadd.f32 %v813, 1e-05
    %v816 = vrsqrt.pop %v814
    %v817 = vrsqrt.pop %v815
    %v818 = vmul.f32 %v802, %v816
    %v819 = vmul.f32 %v803, %v817
    %v821 = vlaneseq
    %v822 = vshrl.u32 %v821, 7
    %v823 = vsub.s32 0, %v822
    %v824 = vrot.slane %v791, %v823
    %v826 = vmul.f32 %v818, %v824
    %v827 = vmul.f32 %v819, %v824
    %v829 = vlaneseq
    %v830 = vshrl.u32 %v829, 7
    %v831 = vsub.s32 0, %v830
    %v832 = vrot.slane %v792, %v831
    %v834 = vadd.f32 %v826, %v832
    %v835 = vadd.f32 %v827, %v832
    %837 = vset.pattern.permute.xlu0 0
    %838 = vperm.xlu0 %837, %v70
    %v839 = vpop.permute.xlu0 %838
    %842 = vset.pattern.permute.xlu0 0
    %843 = vperm.xlu0 %842, %v71
    %v844 = vpop.permute.xlu0 %843
    %v846 = vmul.f32 %v834, %v839
    %v847 = vmul.f32 %v835, %v844
    %v848 = vpack.c.bf16 %v847, %v846
    %v849 = vlaneseq
    %v850 = vshrl.u32 %v849, 7
    %v851 = vld [vmem:[#allocation2] sm:$0xff]
    %v852 = vld [vmem:[#allocation2 + $0x8] sm:$0xff]
    %v853 = vld [vmem:[#allocation2 + $0x10] sm:$0xff]
    %v854 = vld [vmem:[#allocation2 + $0x18] sm:$0xff]
    %v855 = vpack.c.bf16 %v852, %v851
    %v856 = vpack.c.bf16 %v854, %v853
    %v858 = vsel %vm88, %v848, 0
    %860 = vmatprep.subr.bf16.mxu0 0
    %861 = vmatpush1.bf16.msra.mxu0 %v855
    %862 = vmatprep.subr.bf16.mxu0 0
    %863 = vmatpush1.bf16.msra.mxu0 %v856
    %864 = vmatprep.subr.bf16.mxu0 0
    %865 = vmatpush1.bf16.msra.mxu0 0
    %866 = vmatprep.subr.bf16.mxu0 0
    %867 = vmatpush1.bf16.msra.mxu0 0
    %868 = vmatprep.subr.bf16.mxu0 0
    %869 = vmatpush1.bf16.msra.mxu0 0
    %870 = vmatprep.subr.bf16.mxu0 0
    %871 = vmatpush1.bf16.msra.mxu0 0
    %872 = vmatprep.subr.bf16.mxu0 0
    %873 = vmatpush1.bf16.msra.mxu0 0
    %874 = vmatprep.subr.bf16.mxu0 0
    %875 = vmatpush1.bf16.msra.mxu0 0
    %876 = vmatprep.subr.bf16.mxu0 0
    %877 = vmatpush1.bf16.msra.mxu0 0
    %878 = vmatprep.subr.bf16.mxu0 0
    %879 = vmatpush1.bf16.msra.mxu0 0
    %880 = vmatprep.subr.bf16.mxu0 0
    %881 = vmatpush1.bf16.msra.mxu0 0
    %882 = vmatprep.subr.bf16.mxu0 0
    %883 = vmatpush1.bf16.msra.mxu0 0
    %884 = vmatprep.subr.bf16.mxu0 0
    %885 = vmatpush1.bf16.msra.mxu0 0
    %886 = vmatprep.subr.bf16.mxu0 0
    %887 = vmatpush1.bf16.msra.mxu0 0
    %888 = vmatprep.subr.bf16.mxu0 0
    %889 = vmatpush1.bf16.msra.mxu0 0
    %890 = vmatprep.subr.bf16.mxu0 0
    %891 = vmatpush1.bf16.msra.mxu0 0
    %892 = vmatprep.mubr.bf16.mxu0 0
    %893 = vmatmul.mubr.bf16.gmra.mrb[0].mxu0 %v858
    %v894 = vpop.f32.mrb[0].mxu0
    %v895 = vadd.f32 0.0, %v894
    %v896 = vpop.f32.mrb[0].mxu0
    %v897 = vpop.f32.mrb[0].mxu0
    %v898 = vadd.f32 0.0, %v897
    %v899 = vpop.f32.mrb[0].mxu0
    %900 = vdwg.mxu0
    %v903 = vrot.slane %v895, 4
    %v904 = vrot.slane %v898, 4
    %v905 = vsel %vm217, %v903, %v904
    %v908 = vsel %vm217, 0.0, %v903
    %v909 = vadd.s32 %v850, 4294967292
    %vm910 = vcmp.ge.s32.totalorder %v909, 0
    %vm911 = vcmp.lt.s32.totalorder %v909, 8
    %vm912 = vmand %vm910, %vm911
    %v913 = vsel %vm912, 1, 0
    %vm914 = vcmp.eq.s32.totalorder %v913, 1
    %v915 = vsel %vm914, %v908, 0.0
    %v916 = vsel %vm914, %v905, 0.0
    %v917 = vadd.f32 %v915, 0.0
    %v918 = vadd.f32 %v916, 0.0
    %s919 = scalar_lea.vmem [#allocation2], 32
    %v920 = vld [vmem:[%s919] sm:$0xff]
    %v921 = vld [vmem:[%s919 + $0x8] sm:$0xff]
    %v922 = vld [vmem:[%s919 + $0x10] sm:$0xff]
    %v923 = vld [vmem:[%s919 + $0x18] sm:$0xff]
    %v924 = vpack.c.bf16 %v921, %v920
    %v925 = vpack.c.bf16 %v923, %v922
    %926 = vmatprep.subr.bf16.mxu0 0
    %927 = vmatpush1.bf16.msra.mxu0 %v924
    %928 = vmatprep.subr.bf16.mxu0 0
    %929 = vmatpush1.bf16.msra.mxu0 %v925
    %930 = vmatprep.subr.bf16.mxu0 0
    %931 = vmatpush1.bf16.msra.mxu0 0
    %932 = vmatprep.subr.bf16.mxu0 0
    %933 = vmatpush1.bf16.msra.mxu0 0
    %934 = vmatprep.subr.bf16.mxu0 0
    %935 = vmatpush1.bf16.msra.mxu0 0
    %936 = vmatprep.subr.bf16.mxu0 0
    %937 = vmatpush1.bf16.msra.mxu0 0
    %938 = vmatprep.subr.bf16.mxu0 0
    %939 = vmatpush1.bf16.msra.mxu0 0
    %940 = vmatprep.subr.bf16.mxu0 0
    %941 = vmatpush1.bf16.msra.mxu0 0
    %942 = vmatprep.subr.bf16.mxu0 0
    %943 = vmatpush1.bf16.msra.mxu0 0
    %944 = vmatprep.subr.bf16.mxu0 0
    %945 = vmatpush1.bf16.msra.mxu0 0
    %946 = vmatprep.subr.bf16.mxu0 0
    %947 = vmatpush1.bf16.msra.mxu0 0
    %948 = vmatprep.subr.bf16.mxu0 0
    %949 = vmatpush1.bf16.msra.mxu0 0
    %950 = vmatprep.subr.bf16.mxu0 0
    %951 = vmatpush1.bf16.msra.mxu0 0
    %952 = vmatprep.subr.bf16.mxu0 0
    %953 = vmatpush1.bf16.msra.mxu0 0
    %954 = vmatprep.subr.bf16.mxu0 0
    %955 = vmatpush1.bf16.msra.mxu0 0
    %956 = vmatprep.subr.bf16.mxu0 0
    %957 = vmatpush1.bf16.msra.mxu0 0
    %958 = vmatprep.mubr.bf16.mxu0 0
    %959 = vmatmul.mubr.bf16.gmra.mrb[0].mxu0 %v858
    %v960 = vpop.f32.mrb[0].mxu0
    %v961 = vadd.f32 0.0, %v960
    %v962 = vpop.f32.mrb[0].mxu0
    %v963 = vpop.f32.mrb[0].mxu0
    %v964 = vadd.f32 0.0, %v963
    %v965 = vpop.f32.mrb[0].mxu0
    %966 = vdwg.mxu0
    %vm969 = vcmask 1042432
    %v970 = vrot.slane %v961, 5
    %v971 = vrot.slane %v964, 5
    %v972 = vsel %vm969, %v970, %v971
    %v975 = vsel %vm969, 0.0, %v970
    %v976 = vadd.s32 %v850, 4294967293
    %vm977 = vcmp.ge.s32.totalorder %v976, 0
    %vm978 = vcmp.lt.s32.totalorder %v976, 8
    %vm979 = vmand %vm977, %vm978
    %v980 = vsel %vm979, 1, 0
    %vm981 = vcmp.eq.s32.totalorder %v980, 1
    %v982 = vsel %vm981, %v975, 0.0
    %v983 = vsel %vm981, %v972, 0.0
    %v984 = vadd.f32 %v917, %v982
    %v985 = vadd.f32 %v918, %v983
    %s986 = scalar_lea.vmem [#allocation2], 64
    %v987 = vld [vmem:[%s986] sm:$0xff]
    %v988 = vld [vmem:[%s986 + $0x8] sm:$0xff]
    %v989 = vld [vmem:[%s986 + $0x10] sm:$0xff]
    %v990 = vld [vmem:[%s986 + $0x18] sm:$0xff]
    %v991 = vpack.c.bf16 %v988, %v987
    %v992 = vpack.c.bf16 %v990, %v989
    %993 = vmatprep.subr.bf16.mxu0 0
    %994 = vmatpush1.bf16.msra.mxu0 %v991
    %995 = vmatprep.subr.bf16.mxu0 0
    %996 = vmatpush1.bf16.msra.mxu0 %v992
    %997 = vmatprep.subr.bf16.mxu0 0
    %998 = vmatpush1.bf16.msra.mxu0 0
    %999 = vmatprep.subr.bf16.mxu0 0
    %1000 = vmatpush1.bf16.msra.mxu0 0
    %1001 = vmatprep.subr.bf16.mxu0 0
    %1002 = vmatpush1.bf16.msra.mxu0 0
    %1003 = vmatprep.subr.bf16.mxu0 0
    %1004 = vmatpush1.bf16.msra.mxu0 0
    %1005 = vmatprep.subr.bf16.mxu0 0
    %1006 = vmatpush1.bf16.msra.mxu0 0
    %1007 = vmatprep.subr.bf16.mxu0 0
    %1008 = vmatpush1.bf16.msra.mxu0 0
    %1009 = vmatprep.subr.bf16.mxu0 0
    %1010 = vmatpush1.bf16.msra.mxu0 0
    %1011 = vmatprep.subr.bf16.mxu0 0
    %1012 = vmatpush1.bf16.msra.mxu0 0
    %1013 = vmatprep.subr.bf16.mxu0 0
    %1014 = vmatpush1.bf16.msra.mxu0 0
    %1015 = vmatprep.subr.bf16.mxu0 0
    %1016 = vmatpush1.bf16.msra.mxu0 0
    %1017 = vmatprep.subr.bf16.mxu0 0
    %1018 = vmatpush1.bf16.msra.mxu0 0
    %1019 = vmatprep.subr.bf16.mxu0 0
    %1020 = vmatpush1.bf16.msra.mxu0 0
    %1021 = vmatprep.subr.bf16.mxu0 0
    %1022 = vmatpush1.bf16.msra.mxu0 0
    %1023 = vmatprep.subr.bf16.mxu0 0
    %1024 = vmatpush1.bf16.msra.mxu0 0
    %1025 = vmatprep.mubr.bf16.mxu0 0
    %1026 = vmatmul.mubr.bf16.gmra.mrb[0].mxu0 %v858
    %v1027 = vpop.f32.mrb[0].mxu0
    %v1028 = vadd.f32 0.0, %v1027
    %v1029 = vpop.f32.mrb[0].mxu0
    %v1030 = vpop.f32.mrb[0].mxu0
    %v1031 = vadd.f32 0.0, %v1030
    %v1032 = vpop.f32.mrb[0].mxu0
    %1033 = vdwg.mxu0
    %vm1036 = vcmask 1041408
    %v1037 = vrot.slane %v1028, 6
    %v1038 = vrot.slane %v1031, 6
    %v1039 = vsel %vm1036, %v1037, %v1038
    %v1042 = vsel %vm1036, 0.0, %v1037
    %v1043 = vadd.s32 %v850, 4294967294
    %vm1044 = vcmp.ge.s32.totalorder %v1043, 0
    %vm1045 = vcmp.lt.s32.totalorder %v1043, 8
    %vm1046 = vmand %vm1044, %vm1045
    %v1047 = vsel %vm1046, 1, 0
    %vm1048 = vcmp.eq.s32.totalorder %v1047, 1
    %v1049 = vsel %vm1048, %v1042, 0.0
    %v1050 = vsel %vm1048, %v1039, 0.0
    %v1051 = vadd.f32 %v984, %v1049
    %v1052 = vadd.f32 %v985, %v1050
    %s1053 = scalar_lea.vmem [#allocation2], 96
    %v1054 = vld [vmem:[%s1053] sm:$0xff]
    %v1055 = vld [vmem:[%s1053 + $0x8] sm:$0xff]
    %v1056 = vld [vmem:[%s1053 + $0x10] sm:$0xff]
    %v1057 = vld [vmem:[%s1053 + $0x18] sm:$0xff]
    %v1058 = vpack.c.bf16 %v1055, %v1054
    %v1059 = vpack.c.bf16 %v1057, %v1056
    %1060 = vmatprep.subr.bf16.mxu0 0
    %1061 = vmatpush1.bf16.msra.mxu0 %v1058
    %1062 = vmatprep.subr.bf16.mxu0 0
    %1063 = vmatpush1.bf16.msra.mxu0 %v1059
    %1064 = vmatprep.subr.bf16.mxu0 0
    %1065 = vmatpush1.bf16.msra.mxu0 0
    %1066 = vmatprep.subr.bf16.mxu0 0
    %1067 = vmatpush1.bf16.msra.mxu0 0
    %1068 = vmatprep.subr.bf16.mxu0 0
    %1069 = vmatpush1.bf16.msra.mxu0 0
    %1070 = vmatprep.subr.bf16.mxu0 0
    %1071 = vmatpush1.bf16.msra.mxu0 0
    %1072 = vmatprep.subr.bf16.mxu0 0
    %1073 = vmatpush1.bf16.msra.mxu0 0
    %1074 = vmatprep.subr.bf16.mxu0 0
    %1075 = vmatpush1.bf16.msra.mxu0 0
    %1076 = vmatprep.subr.bf16.mxu0 0
    %1077 = vmatpush1.bf16.msra.mxu0 0
    %1078 = vmatprep.subr.bf16.mxu0 0
    %1079 = vmatpush1.bf16.msra.mxu0 0
    %1080 = vmatprep.subr.bf16.mxu0 0
    %1081 = vmatpush1.bf16.msra.mxu0 0
    %1082 = vmatprep.subr.bf16.mxu0 0
    %1083 = vmatpush1.bf16.msra.mxu0 0
    %1084 = vmatprep.subr.bf16.mxu0 0
    %1085 = vmatpush1.bf16.msra.mxu0 0
    %1086 = vmatprep.subr.bf16.mxu0 0
    %1087 = vmatpush1.bf16.msra.mxu0 0
    %1088 = vmatprep.subr.bf16.mxu0 0
    %1089 = vmatpush1.bf16.msra.mxu0 0
    %1090 = vmatprep.subr.bf16.mxu0 0
    %1091 = vmatpush1.bf16.msra.mxu0 0
    %1092 = vmatprep.mubr.bf16.mxu0 0
    %1093 = vmatmul.mubr.bf16.gmra.mrb[0].mxu0 %v858
    %v1094 = vpop.f32.mrb[0].mxu0
    %v1095 = vadd.f32 0.0, %v1094
    %v1096 = vpop.f32.mrb[0].mxu0
    %v1097 = vpop.f32.mrb[0].mxu0
    %v1098 = vadd.f32 0.0, %v1097
    %v1099 = vpop.f32.mrb[0].mxu0
    %1100 = vdwg.mxu0
    %vm1103 = vcmask 1040384
    %v1104 = vrot.slane %v1095, 7
    %v1105 = vrot.slane %v1098, 7
    %v1106 = vsel %vm1103, %v1104, %v1105
    %v1109 = vsel %vm1103, 0.0, %v1104
    %v1110 = vadd.s32 %v850, 4294967295
    %vm1111 = vcmp.ge.s32.totalorder %v1110, 0
    %vm1112 = vcmp.lt.s32.totalorder %v1110, 8
    %vm1113 = vmand %vm1111, %vm1112
    %v1114 = vsel %vm1113, 1, 0
    %vm1115 = vcmp.eq.s32.totalorder %v1114, 1
    %v1116 = vsel %vm1115, %v1109, 0.0
    %v1117 = vsel %vm1115, %v1106, 0.0
    %v1118 = vadd.f32 %v1051, %v1116
    %v1119 = vadd.f32 %v1052, %v1117
    %s1120 = scalar_lea.vmem [#allocation2], 128
    %v1121 = vld [vmem:[%s1120] sm:$0xff]
    %v1122 = vld [vmem:[%s1120 + $0x8] sm:$0xff]
    %v1123 = vld [vmem:[%s1120 + $0x10] sm:$0xff]
    %v1124 = vld [vmem:[%s1120 + $0x18] sm:$0xff]
    %v1125 = vpack.c.bf16 %v1122, %v1121
    %v1126 = vpack.c.bf16 %v1124, %v1123
    %1127 = vmatprep.subr.bf16.mxu0 0
    %1128 = vmatpush1.bf16.msra.mxu0 %v1125
    %1129 = vmatprep.subr.bf16.mxu0 0
    %1130 = vmatpush1.bf16.msra.mxu0 %v1126
    %1131 = vmatprep.subr.bf16.mxu0 0
    %1132 = vmatpush1.bf16.msra.mxu0 0
    %1133 = vmatprep.subr.bf16.mxu0 0
    %1134 = vmatpush1.bf16.msra.mxu0 0
    %1135 = vmatprep.subr.bf16.mxu0 0
    %1136 = vmatpush1.bf16.msra.mxu0 0
    %1137 = vmatprep.subr.bf16.mxu0 0
    %1138 = vmatpush1.bf16.msra.mxu0 0
    %1139 = vmatprep.subr.bf16.mxu0 0
    %1140 = vmatpush1.bf16.msra.mxu0 0
    %1141 = vmatprep.subr.bf16.mxu0 0
    %1142 = vmatpush1.bf16.msra.mxu0 0
    %1143 = vmatprep.subr.bf16.mxu0 0
    %1144 = vmatpush1.bf16.msra.mxu0 0
    %1145 = vmatprep.subr.bf16.mxu0 0
    %1146 = vmatpush1.bf16.msra.mxu0 0
    %1147 = vmatprep.subr.bf16.mxu0 0
    %1148 = vmatpush1.bf16.msra.mxu0 0
    %1149 = vmatprep.subr.bf16.mxu0 0
    %1150 = vmatpush1.bf16.msra.mxu0 0
    %1151 = vmatprep.subr.bf16.mxu0 0
    %1152 = vmatpush1.bf16.msra.mxu0 0
    %1153 = vmatprep.subr.bf16.mxu0 0
    %1154 = vmatpush1.bf16.msra.mxu0 0
    %1155 = vmatprep.subr.bf16.mxu0 0
    %1156 = vmatpush1.bf16.msra.mxu0 0
    %1157 = vmatprep.subr.bf16.mxu0 0
    %1158 = vmatpush1.bf16.msra.mxu0 0
    %1159 = vmatprep.mubr.bf16.mxu0 0
    %1160 = vmatmul.mubr.bf16.gmra.mrb[0].mxu0 %v858
    %v1161 = vpop.f32.mrb[0].mxu0
    %v1162 = vadd.f32 0.0, %v1161
    %v1163 = vpop.f32.mrb[0].mxu0
    %v1164 = vpop.f32.mrb[0].mxu0
    %v1165 = vadd.f32 0.0, %v1164
    %v1166 = vpop.f32.mrb[0].mxu0
    %1167 = vdwg.mxu0
    %vm1168 = vcmp.ge.s32.totalorder %v850, 0
    %vm1169 = vcmp.lt.s32.totalorder %v850, 8
    %vm1170 = vmand %vm1168, %vm1169
    %v1171 = vsel %vm1170, 1, 0
    %vm1172 = vcmp.eq.s32.totalorder %v1171, 1
    %v1173 = vsel %vm1172, %v1162, 0.0
    %v1174 = vsel %vm1172, %v1165, 0.0
    %v1175 = vadd.f32 %v1118, %v1173
    %v1176 = vadd.f32 %v1119, %v1174
    %s1177 = scalar_lea.vmem [#allocation2], 160
    %v1178 = vld [vmem:[%s1177] sm:$0xff]
    %v1179 = vld [vmem:[%s1177 + $0x8] sm:$0xff]
    %v1180 = vld [vmem:[%s1177 + $0x10] sm:$0xff]
    %v1181 = vld [vmem:[%s1177 + $0x18] sm:$0xff]
    %v1182 = vpack.c.bf16 %v1179, %v1178
    %v1183 = vpack.c.bf16 %v1181, %v1180
    %1184 = vmatprep.subr.bf16.mxu0 0
    %1185 = vmatpush1.bf16.msra.mxu0 %v1182
    %1186 = vmatprep.subr.bf16.mxu0 0
    %1187 = vmatpush1.bf16.msra.mxu0 %v1183
    %1188 = vmatprep.subr.bf16.mxu0 0
    %1189 = vmatpush1.bf16.msra.mxu0 0
    %1190 = vmatprep.subr.bf16.mxu0 0
    %1191 = vmatpush1.bf16.msra.mxu0 0
    %1192 = vmatprep.subr.bf16.mxu0 0
    %1193 = vmatpush1.bf16.msra.mxu0 0
    %1194 = vmatprep.subr.bf16.mxu0 0
    %1195 = vmatpush1.bf16.msra.mxu0 0
    %1196 = vmatprep.subr.bf16.mxu0 0
    %1197 = vmatpush1.bf16.msra.mxu0 0
    %1198 = vmatprep.subr.bf16.mxu0 0
    %1199 = vmatpush1.bf16.msra.mxu0 0
    %1200 = vmatprep.subr.bf16.mxu0 0
    %1201 = vmatpush1.bf16.msra.mxu0 0
    %1202 = vmatprep.subr.bf16.mxu0 0
    %1203 = vmatpush1.bf16.msra.mxu0 0
    %1204 = vmatprep.subr.bf16.mxu0 0
    %1205 = vmatpush1.bf16.msra.mxu0 0
    %1206 = vmatprep.subr.bf16.mxu0 0
    %1207 = vmatpush1.bf16.msra.mxu0 0
    %1208 = vmatprep.subr.bf16.mxu0 0
    %1209 = vmatpush1.bf16.msra.mxu0 0
    %1210 = vmatprep.subr.bf16.mxu0 0
    %1211 = vmatpush1.bf16.msra.mxu0 0
    %1212 = vmatprep.subr.bf16.mxu0 0
    %1213 = vmatpush1.bf16.msra.mxu0 0
    %1214 = vmatprep.subr.bf16.mxu0 0
    %1215 = vmatpush1.bf16.msra.mxu0 0
    %1216 = vmatprep.mubr.bf16.mxu0 0
    %1217 = vmatmul.mubr.bf16.gmra.mrb[0].mxu0 %v858
    %v1218 = vpop.f32.mrb[0].mxu0
    %v1219 = vadd.f32 0.0, %v1218
    %v1220 = vpop.f32.mrb[0].mxu0
    %v1221 = vpop.f32.mrb[0].mxu0
    %v1222 = vadd.f32 0.0, %v1221
    %v1223 = vpop.f32.mrb[0].mxu0
    %1224 = vdwg.mxu0
    %vm1227 = vcmask 1046528
    %v1228 = vrot.slane %v1219, 1
    %v1229 = vrot.slane %v1222, 1
    %v1230 = vsel %vm1227, %v1228, %v1229
    %v1233 = vsel %vm1227, %v1229, 0.0
    %v1234 = vadd.s32 %v850, 1
    %vm1235 = vcmp.ge.s32.totalorder %v1234, 0
    %vm1236 = vcmp.lt.s32.totalorder %v1234, 8
    %vm1237 = vmand %vm1235, %vm1236
    %v1238 = vsel %vm1237, 1, 0
    %vm1239 = vcmp.eq.s32.totalorder %v1238, 1
    %v1240 = vsel %vm1239, %v1230, 0.0
    %v1241 = vsel %vm1239, %v1233, 0.0
    %v1242 = vadd.f32 %v1175, %v1240
    %v1243 = vadd.f32 %v1176, %v1241
    %s1244 = scalar_lea.vmem [#allocation2], 192
    %v1245 = vld [vmem:[%s1244] sm:$0xff]
    %v1246 = vld [vmem:[%s1244 + $0x8] sm:$0xff]
    %v1247 = vld [vmem:[%s1244 + $0x10] sm:$0xff]
    %v1248 = vld [vmem:[%s1244 + $0x18] sm:$0xff]
    %v1249 = vpack.c.bf16 %v1246, %v1245
    %v1250 = vpack.c.bf16 %v1248, %v1247
    %1251 = vmatprep.subr.bf16.mxu0 0
    %1252 = vmatpush1.bf16.msra.mxu0 %v1249
    %1253 = vmatprep.subr.bf16.mxu0 0
    %1254 = vmatpush1.bf16.msra.mxu0 %v1250
    %1255 = vmatprep.subr.bf16.mxu0 0
    %1256 = vmatpush1.bf16.msra.mxu0 0
    %1257 = vmatprep.subr.bf16.mxu0 0
    %1258 = vmatpush1.bf16.msra.mxu0 0
    %1259 = vmatprep.subr.bf16.mxu0 0
    %1260 = vmatpush1.bf16.msra.mxu0 0
    %1261 = vmatprep.subr.bf16.mxu0 0
    %1262 = vmatpush1.bf16.msra.mxu0 0
    %1263 = vmatprep.subr.bf16.mxu0 0
    %1264 = vmatpush1.bf16.msra.mxu0 0
    %1265 = vmatprep.subr.bf16.mxu0 0
    %1266 = vmatpush1.bf16.msra.mxu0 0
    %1267 = vmatprep.subr.bf16.mxu0 0
    %1268 = vmatpush1.bf16.msra.mxu0 0
    %1269 = vmatprep.subr.bf16.mxu0 0
    %1270 = vmatpush1.bf16.msra.mxu0 0
    %1271 = vmatprep.subr.bf16.mxu0 0
    %1272 = vmatpush1.bf16.msra.mxu0 0
    %1273 = vmatprep.subr.bf16.mxu0 0
    %1274 = vmatpush1.bf16.msra.mxu0 0
    %1275 = vmatprep.subr.bf16.mxu0 0
    %1276 = vmatpush1.bf16.msra.mxu0 0
    %1277 = vmatprep.subr.bf16.mxu0 0
    %1278 = vmatpush1.bf16.msra.mxu0 0
    %1279 = vmatprep.subr.bf16.mxu0 0
    %1280 = vmatpush1.bf16.msra.mxu0 0
    %1281 = vmatprep.subr.bf16.mxu0 0
    %1282 = vmatpush1.bf16.msra.mxu0 0
    %1283 = vmatprep.mubr.bf16.mxu0 0
    %1284 = vmatmul.mubr.bf16.gmra.mrb[0].mxu0 %v858
    %v1285 = vpop.f32.mrb[0].mxu0
    %v1286 = vadd.f32 0.0, %v1285
    %v1287 = vpop.f32.mrb[0].mxu0
    %v1288 = vpop.f32.mrb[0].mxu0
    %v1289 = vadd.f32 0.0, %v1288
    %v1290 = vpop.f32.mrb[0].mxu0
    %1291 = vdwg.mxu0
    %vm1294 = vcmask 1045504
    %v1295 = vrot.slane %v1286, 2
    %v1296 = vrot.slane %v1289, 2
    %v1297 = vsel %vm1294, %v1295, %v1296
    %v1300 = vsel %vm1294, %v1296, 0.0
    %v1301 = vadd.s32 %v850, 2
    %vm1302 = vcmp.ge.s32.totalorder %v1301, 0
    %vm1303 = vcmp.lt.s32.totalorder %v1301, 8
    %vm1304 = vmand %vm1302, %vm1303
    %v1305 = vsel %vm1304, 1, 0
    %vm1306 = vcmp.eq.s32.totalorder %v1305, 1
    %v1307 = vsel %vm1306, %v1297, 0.0
    %v1308 = vsel %vm1306, %v1300, 0.0
    %v1309 = vadd.f32 %v1242, %v1307
    %v1310 = vadd.f32 %v1243, %v1308
    %s1311 = scalar_lea.vmem [#allocation2], 224
    %v1312 = vld [vmem:[%s1311] sm:$0xff]
    %v1313 = vld [vmem:[%s1311 + $0x8] sm:$0xff]
    %v1314 = vld [vmem:[%s1311 + $0x10] sm:$0xff]
    %v1315 = vld [vmem:[%s1311 + $0x18] sm:$0xff]
    %v1316 = vpack.c.bf16 %v1313, %v1312
    %v1317 = vpack.c.bf16 %v1315, %v1314
    %1318 = vmatprep.subr.bf16.mxu0 0
    %1319 = vmatpush1.bf16.msra.mxu0 %v1316
    %1320 = vmatprep.subr.bf16.mxu0 0
    %1321 = vmatpush1.bf16.msra.mxu0 %v1317
    %1322 = vmatprep.subr.bf16.mxu0 0
    %1323 = vmatpush1.bf16.msra.mxu0 0
    %1324 = vmatprep.subr.bf16.mxu0 0
    %1325 = vmatpush1.bf16.msra.mxu0 0
    %1326 = vmatprep.subr.bf16.mxu0 0
    %1327 = vmatpush1.bf16.msra.mxu0 0
    %1328 = vmatprep.subr.bf16.mxu0 0
    %1329 = vmatpush1.bf16.msra.mxu0 0
    %1330 = vmatprep.subr.bf16.mxu0 0
    %1331 = vmatpush1.bf16.msra.mxu0 0
    %1332 = vmatprep.subr.bf16.mxu0 0
    %1333 = vmatpush1.bf16.msra.mxu0 0
    %1334 = vmatprep.subr.bf16.mxu0 0
    %1335 = vmatpush1.bf16.msra.mxu0 0
    %1336 = vmatprep.subr.bf16.mxu0 0
    %1337 = vmatpush1.bf16.msra.mxu0 0
    %1338 = vmatprep.subr.bf16.mxu0 0
    %1339 = vmatpush1.bf16.msra.mxu0 0
    %1340 = vmatprep.subr.bf16.mxu0 0
    %1341 = vmatpush1.bf16.msra.mxu0 0
    %1342 = vmatprep.subr.bf16.mxu0 0
    %1343 = vmatpush1.bf16.msra.mxu0 0
    %1344 = vmatprep.subr.bf16.mxu0 0
    %1345 = vmatpush1.bf16.msra.mxu0 0
    %1346 = vmatprep.subr.bf16.mxu0 0
    %1347 = vmatpush1.bf16.msra.mxu0 0
    %1348 = vmatprep.subr.bf16.mxu0 0
    %1349 = vmatpush1.bf16.msra.mxu0 0
    %1350 = vmatprep.mubr.bf16.mxu0 0
    %1351 = vmatmul.mubr.bf16.gmra.mrb[0].mxu0 %v858
    %v1352 = vpop.f32.mrb[0].mxu0
    %v1353 = vadd.f32 0.0, %v1352
    %v1354 = vpop.f32.mrb[0].mxu0
    %v1355 = vpop.f32.mrb[0].mxu0
    %v1356 = vadd.f32 0.0, %v1355
    %v1357 = vpop.f32.mrb[0].mxu0
    %1358 = vdwg.mxu0
    %vm1361 = vcmask 1044480
    %v1362 = vrot.slane %v1353, 3
    %v1363 = vrot.slane %v1356, 3
    %v1364 = vsel %vm1361, %v1362, %v1363
    %v1367 = vsel %vm1361, %v1363, 0.0
    %v1368 = vadd.s32 %v850, 3
    %vm1369 = vcmp.ge.s32.totalorder %v1368, 0
    %vm1370 = vcmp.lt.s32.totalorder %v1368, 8
    %vm1371 = vmand %vm1369, %vm1370
    %v1372 = vsel %vm1371, 1, 0
    %vm1373 = vcmp.eq.s32.totalorder %v1372, 1
    %v1374 = vsel %vm1373, %v1364, 0.0
    %v1375 = vsel %vm1373, %v1367, 0.0
    %v1376 = vadd.f32 %v1309, %v1374
    %v1377 = vadd.f32 %v1310, %v1375
    %s1378 = scalar_lea.vmem [#allocation2], 256
    %v1379 = vld [vmem:[%s1378] sm:$0xff]
    %v1380 = vld [vmem:[%s1378 + $0x8] sm:$0xff]
    %v1381 = vld [vmem:[%s1378 + $0x10] sm:$0xff]
    %v1382 = vld [vmem:[%s1378 + $0x18] sm:$0xff]
    %v1383 = vpack.c.bf16 %v1380, %v1379
    %v1384 = vpack.c.bf16 %v1382, %v1381
    %1385 = vmatprep.subr.bf16.mxu0 0
    %1386 = vmatpush1.bf16.msra.mxu0 %v1383
    %1387 = vmatprep.subr.bf16.mxu0 0
    %1388 = vmatpush1.bf16.msra.mxu0 %v1384
    %1389 = vmatprep.subr.bf16.mxu0 0
    %1390 = vmatpush1.bf16.msra.mxu0 0
    %1391 = vmatprep.subr.bf16.mxu0 0
    %1392 = vmatpush1.bf16.msra.mxu0 0
    %1393 = vmatprep.subr.bf16.mxu0 0
    %1394 = vmatpush1.bf16.msra.mxu0 0
    %1395 = vmatprep.subr.bf16.mxu0 0
    %1396 = vmatpush1.bf16.msra.mxu0 0
    %1397 = vmatprep.subr.bf16.mxu0 0
    %1398 = vmatpush1.bf16.msra.mxu0 0
    %1399 = vmatprep.subr.bf16.mxu0 0
    %1400 = vmatpush1.bf16.msra.mxu0 0
    %1401 = vmatprep.subr.bf16.mxu0 0
    %1402 = vmatpush1.bf16.msra.mxu0 0
    %1403 = vmatprep.subr.bf16.mxu0 0
    %1404 = vmatpush1.bf16.msra.mxu0 0
    %1405 = vmatprep.subr.bf16.mxu0 0
    %1406 = vmatpush1.bf16.msra.mxu0 0
    %1407 = vmatprep.subr.bf16.mxu0 0
    %1408 = vmatpush1.bf16.msra.mxu0 0
    %1409 = vmatprep.subr.bf16.mxu0 0
    %1410 = vmatpush1.bf16.msra.mxu0 0
    %1411 = vmatprep.subr.bf16.mxu0 0
    %1412 = vmatpush1.bf16.msra.mxu0 0
    %1413 = vmatprep.subr.bf16.mxu0 0
    %1414 = vmatpush1.bf16.msra.mxu0 0
    %1415 = vmatprep.subr.bf16.mxu0 0
    %1416 = vmatpush1.bf16.msra.mxu0 0
    %1417 = vmatprep.mubr.bf16.mxu0 0
    %1418 = vmatmul.mubr.bf16.gmra.mrb[0].mxu0 %v858
    %v1419 = vpop.f32.mrb[0].mxu0
    %v1420 = vadd.f32 0.0, %v1419
    %v1421 = vpop.f32.mrb[0].mxu0
    %v1422 = vpop.f32.mrb[0].mxu0
    %v1423 = vadd.f32 0.0, %v1422
    %v1424 = vpop.f32.mrb[0].mxu0
    %1425 = vdwg.mxu0
    %v1428 = vrot.slane %v1420, 4
    %v1429 = vrot.slane %v1423, 4
    %v1430 = vsel %vm217, %v1428, %v1429
    %v1433 = vsel %vm217, %v1429, 0.0
    %v1434 = vadd.s32 %v850, 4
    %vm1435 = vcmp.ge.s32.totalorder %v1434, 0
    %vm1436 = vcmp.lt.s32.totalorder %v1434, 8
    %vm1437 = vmand %vm1435, %vm1436
    %v1438 = vsel %vm1437, 1, 0
    %vm1439 = vcmp.eq.s32.totalorder %v1438, 1
    %v1440 = vsel %vm1439, %v1430, 0.0
    %v1441 = vsel %vm1439, %v1433, 0.0
    %v1442 = vadd.f32 %v1376, %v1440
    %v1443 = vadd.f32 %v1377, %v1441
    %v1444 = vld [vmem:[%s10] sm:$0x1]
    %v1446 = vlaneseq
    %v1447 = vshrl.u32 %v1446, 7
    %v1448 = vsub.s32 0, %v1447
    %v1449 = vrot.slane %v1444, %v1448
    %v1451 = vadd.f32 %v1442, %v1449
    %v1452 = vadd.f32 %v1443, %v1449
    %v1453 = vmax.f32 %v1451, 0.0
    %v1454 = vmax.f32 %v1452, 0.0
    %v1455 = vpack.c.bf16 %v1454, %v1453
    %v1456 = vld [vmem:[%s11] sm:$0xff]
    %v1457 = vld [vmem:[%s11 + $0x8] sm:$0xff]
    %v1458 = vld [vmem:[%s11 + $0x10] sm:$0xff]
    %v1459 = vld [vmem:[%s11 + $0x18] sm:$0xff]
    %v1460 = vld [vmem:[%s11 + $0x20] sm:$0xff]
    %v1461 = vld [vmem:[%s11 + $0x28] sm:$0xff]
    %v1462 = vld [vmem:[%s11 + $0x30] sm:$0xff]
    %v1463 = vld [vmem:[%s11 + $0x38] sm:$0xff]
    %v1464 = vpack.c.bf16 %v1457, %v1456
    %v1465 = vpack.c.bf16 %v1459, %v1458
    %v1466 = vpack.c.bf16 %v1461, %v1460
    %v1467 = vpack.c.bf16 %v1463, %v1462
    %v1468 = vld [vmem:[%s12] sm:$0x1]
    %v1470 = vlaneseq
    %v1471 = vshrl.u32 %v1470, 7
    %v1472 = vsub.s32 0, %v1471
    %v1473 = vrot.slane %v1468, %v1472
    %vm1475 = vcmask 523264
    %v1477 = vsel %vm1475, %v1455, 0
    %1479 = vmatprep.subr.bf16.mxu0 0
    %1480 = vmatpush1.bf16.msra.mxu0 %v1464
    %1481 = vmatprep.subr.bf16.mxu0 0
    %1482 = vmatpush1.bf16.msra.mxu0 %v1465
    %1483 = vmatprep.subr.bf16.mxu0 0
    %1484 = vmatpush1.bf16.msra.mxu0 %v1466
    %1485 = vmatprep.subr.bf16.mxu0 0
    %1486 = vmatpush1.bf16.msra.mxu0 %v1467
    %1487 = vmatprep.subr.bf16.mxu0 0
    %1488 = vmatpush1.bf16.msra.mxu0 0
    %1489 = vmatprep.subr.bf16.mxu0 0
    %1490 = vmatpush1.bf16.msra.mxu0 0
    %1491 = vmatprep.subr.bf16.mxu0 0
    %1492 = vmatpush1.bf16.msra.mxu0 0
    %1493 = vmatprep.subr.bf16.mxu0 0
    %1494 = vmatpush1.bf16.msra.mxu0 0
    %1495 = vmatprep.subr.bf16.mxu0 0
    %1496 = vmatpush1.bf16.msra.mxu0 0
    %1497 = vmatprep.subr.bf16.mxu0 0
    %1498 = vmatpush1.bf16.msra.mxu0 0
    %1499 = vmatprep.subr.bf16.mxu0 0
    %1500 = vmatpush1.bf16.msra.mxu0 0
    %1501 = vmatprep.subr.bf16.mxu0 0
    %1502 = vmatpush1.bf16.msra.mxu0 0
    %1503 = vmatprep.subr.bf16.mxu0 0
    %1504 = vmatpush1.bf16.msra.mxu0 0
    %1505 = vmatprep.subr.bf16.mxu0 0
    %1506 = vmatpush1.bf16.msra.mxu0 0
    %1507 = vmatprep.subr.bf16.mxu0 0
    %1508 = vmatpush1.bf16.msra.mxu0 0
    %1509 = vmatprep.subr.bf16.mxu0 0
    %1510 = vmatpush1.bf16.msra.mxu0 0
    %1511 = vmatprep.mubr.bf16.mxu0 0
    %1512 = vmatmul.mubr.bf16.gmra.mrb[0].mxu0 %v1477
    %v1513 = vpop.f32.mrb[0].mxu0
    %v1514 = vadd.f32 %v1473, %v1513
    %v1515 = vpop.f32.mrb[0].mxu0
    %v1516 = vpop.f32.mrb[0].mxu0
    %v1517 = vadd.f32 %v1473, %v1516
    %v1518 = vpop.f32.mrb[0].mxu0
    %1519 = vdwg.mxu0
    %v1520 = vadd.f32 %v1514, %v846
    %v1521 = vadd.f32 %v1517, %v847
    %v1522 = vld [vmem:[%s13] sm:$0x1]
    %v1523 = vld [vmem:[%s14] sm:$0x1]
    %v1524 = vsel %vm88, %v1520, 0.0
    %1525 = vadd.xlane.f32.xlu0 %v1524
    %v1526 = vpop.xlane.xlu0 %1525
    %v1527 = vsel %vm88, %v1521, 0.0
    %1528 = vadd.xlane.f32.xlu0 %v1527
    %v1529 = vpop.xlane.xlu0 %1528
    %v1530 = vmul.f32 %v1526, %v799
    %v1531 = vmul.f32 %v1529, %v799
    %v1532 = vsub.f32 %v1520, %v1530
    %v1533 = vsub.f32 %v1521, %v1531
    %v1534 = vmul.f32 %v1532, %v1532
    %v1535 = vmul.f32 %v1533, %v1533
    %v1536 = vsel %vm88, %v1534, 0.0
    %1537 = vadd.xlane.f32.xlu0 %v1536
    %v1538 = vpop.xlane.xlu0 %1537
    %v1539 = vsel %vm88, %v1535, 0.0
    %1540 = vadd.xlane.f32.xlu0 %v1539
    %v1541 = vpop.xlane.xlu0 %1540
    %v1542 = vmul.f32 %v1538, %v799
    %v1543 = vmul.f32 %v1541, %v799
    %v1544 = vadd.f32 %v1542, 1e-05
    %v1545 = vadd.f32 %v1543, 1e-05
    %v1546 = vrsqrt.pop %v1544
    %v1547 = vrsqrt.pop %v1545
    %v1548 = vmul.f32 %v1532, %v1546
    %v1549 = vmul.f32 %v1533, %v1547
    %v1551 = vlaneseq
    %v1552 = vshrl.u32 %v1551, 7
    %v1553 = vsub.s32 0, %v1552
    %v1554 = vrot.slane %v1522, %v1553
    %v1556 = vmul.f32 %v1548, %v1554
    %v1557 = vmul.f32 %v1549, %v1554
    %v1559 = vlaneseq
    %v1560 = vshrl.u32 %v1559, 7
    %v1561 = vsub.s32 0, %v1560
    %v1562 = vrot.slane %v1523, %v1561
    %v1564 = vadd.f32 %v1556, %v1562
    %v1565 = vadd.f32 %v1557, %v1562
    %v1566 = vmul.f32 %v1564, %v839
    %v1567 = vmul.f32 %v1565, %v844
    %1568 = vst.msk [vmem:[#allocation5] sm:$0xff] %vm88, %v1566
    %1569 = vst.msk [vmem:[#allocation5 + $0x8] sm:$0xff] %vm88, %v1567
    // Predicated region
    $region66: #{tpu_custom_call.1} parent=1 // pred_check
      _
    $region67: #{tpu_custom_call.1} parent=1 // pred_check_branch
      %1571 = sbr.rel (0) target = $region69
    $region68: #{tpu_custom_call.1} parent=1 // pred_region
      %s1573 = ssub.s32 256, 256
      %1574 = vsyncadd [#allocation4], %s1573
      %s1575 = sshll.u32 [#allocation5], 4
      %s1576 = int_to_ptr.vmem [resolvable:$true] %s1575
      %1581 = dma.vmem_to_hbm [thread:$0]  %s1576, 256, %s15, [#allocation4], 128, 128, 8
    $region69: #{tpu_custom_call.1} parent=1 // pred_fallthru
      _
    // Predicated region
    $region70: #{tpu_custom_call.1} parent=1 // pred_check
      _
    $region71: #{tpu_custom_call.1} parent=1 // pred_check_branch
      %1583 = sbr.rel (0) target = $region73
    $region72: #{tpu_custom_call.1} parent=1 // pred_region
      %1584 = dma.done [#allocation4], 256
    $region73: #{tpu_custom_call.1} parent=1 // pred_fallthru
      _
    %1585 = vsyncpa [#allocation3], 1
    %1586 = vsyncpa [#allocation4], 1

</llo_original>
